<compile_context>
chip_gen: v5e
topology: v5e:2x2
jax: 0.10.0
libtpu: 0.0.40
codegen_flags: <defaults>
</compile_context>

<pallas_src>
import functools

import jax
import jax.numpy as jnp
from jax.experimental import pallas as pl
from jax.experimental.pallas import tpu as pltpu  # noqa: F401  (kept for CompilerParams if scaled up)

# ----------------------------- model config (small) -----------------------------
VOCAB = 100
MAX_POS = 16
HIDDEN = 32
N_HEADS = 4
HEAD_DIM = HIDDEN // N_HEADS
FFN = 64
N_LAYERS = 2
LN_EPS = 1e-12


# ----------------------------- fused encoder kernel ------------------------------
def _encoder_kernel(x_ref, bias_ref, pool_ref,
                    emb_g_ref, emb_b_ref,
                    wqkv_ref, bqkv_ref, wo_ref, bo_ref,
                    ln1_g_ref, ln1_b_ref,
                    w1_ref, b1_ref, w2_ref, b2_ref,
                    ln2_g_ref, ln2_b_ref,
                    o_ref,
                    *, batch, seq, n_heads, head_dim, n_layers, eps):
    """Embedding-LN -> n_layers x (fused QKV, packed attention, out-proj+LN, FFN+LN) -> pooling.

    x_ref:    [B*S, H]          embedded tokens (pre-LN), f32
    bias_ref: [P, P]            combined block-diagonal + key-mask additive bias, P = B*NH*S
    pool_ref: [B, B*S]          masked-mean pooling matrix (mask / clamp(count) pre-folded)
    o_ref:    [B, H]            pooled output (the only HBM store of the kernel)
    """
    hidden = n_heads * head_dim
    f32 = jnp.float32
    bf16 = jnp.bfloat16

    def layer_norm(v, g, b):
        mu = jnp.mean(v, axis=-1, keepdims=True)
        var = jnp.mean(jnp.square(v - mu), axis=-1, keepdims=True)
        return (v - mu) * jax.lax.rsqrt(var + eps) * g + b

    def pack_heads(mat, col_base):
        # [B*S, >=col_base+H] -> [B*NH*S, head_dim]; heads/batches on the sublane axis.
        # Static lane slices + sublane-aligned concat only (cheap, always lowerable).
        parts = []
        for bi in range(batch):
            r0 = bi * seq
            for hi in range(n_heads):
                c0 = col_base + hi * head_dim
                parts.append(mat[r0:r0 + seq, c0:c0 + head_dim])
        return jnp.concatenate(parts, axis=0)

    bias_full = bias_ref[...]                                    # [P, P], hoisted

    # Embedding LayerNorm (no zero-residual array).
    h = layer_norm(x_ref[...], emb_g_ref[...], emb_b_ref[...])   # [B*S, H] f32

    for l in range(n_layers):
        # ---- fused QKV projection: one MXU push (softmax scale pre-folded into Q weights) ----
        qkv = jnp.dot(h.astype(bf16), wqkv_ref[l],
                      preferred_element_type=f32) + bqkv_ref[l]   # [B*S, 3H] f32

        qp = pack_heads(qkv, 0).astype(bf16)                      # [P, dh]
        kp = pack_heads(qkv, hidden).astype(bf16)                 # [P, dh]
        vp = pack_heads(qkv, 2 * hidden).astype(bf16)             # [P, dh]

        # ---- attention for ALL (batch, head) pairs: 2 matmuls + 1 softmax ----
        s = jax.lax.dot_general(qp, kp, (((1,), (1,)), ((), ())),
                                preferred_element_type=f32)       # [P, P] f32
        s = s + bias_full                                         # block-diag + key mask
        m = jnp.max(s, axis=-1, keepdims=True)
        p = jnp.exp(s - m)
        p = p / jnp.sum(p, axis=-1, keepdims=True)                # exact softmax (parity w/ torch)
        ctx = jnp.dot(p.astype(bf16), vp,
                      preferred_element_type=f32)                 # [P, dh] f32, stays in registers

        # ---- output projection + residual + LN1 ----
        # Per-head partial matmuls accumulated in registers (no VMEM scratch, no lane-offset
        # placement); wo is stored per-head as [L, NH, dh, H].
        attn_out = bo_ref[l]                                      # [1, H], broadcasts
        for hi in range(n_heads):
            rows = jnp.concatenate(
                [ctx[(bi * n_heads + hi) * seq:(bi * n_heads + hi + 1) * seq, :]
                 for bi in range(batch)], axis=0)                 # [B*S, dh], sublane-aligned
            attn_out = attn_out + jnp.dot(rows.astype(bf16), wo_ref[l, hi],
                                          preferred_element_type=f32)
        h = layer_norm(attn_out + h, ln1_g_ref[l], ln1_b_ref[l])

        # ---- FFN (GELU) + residual + LN2 ----
        ffn = jnp.dot(h.astype(bf16), w1_ref[l], preferred_element_type=f32) + b1_ref[l]
        # TODO(synk): HF BERT uses exact (erf) GELU; tanh approximation kept for Mosaic portability.
        ffn = jax.nn.gelu(ffn, approximate=True)
        ffn = jnp.dot(ffn.astype(bf16), w2_ref[l], preferred_element_type=f32) + b2_ref[l]
        h = layer_norm(ffn + h, ln2_g_ref[l], ln2_b_ref[l])

    # ---- masked mean pooling as ONE matmul, ONE [B, H] store ----
    # pool_ref[bi, bi*S+s] = mask[bi,s] / clamp(sum_s mask[bi,s], 1e-9); zero elsewhere.
    o_ref[...] = jnp.dot(pool_ref[...], h, preferred_element_type=f32)


# ----------------------------- parameters ----------------------------------------
def init_params(key):
    """Per-layer q/k/v weights are fused into one [H, 3H] QKV weight (with the 1/sqrt(dh)
    softmax scale folded into the Q columns), the output projection is stored per-head as
    [NH, dh, H], and all per-layer tensors are stacked on a leading layer axis.  Matmul
    weights are bf16 (native MXU input); biases / LayerNorm params stay f32."""
    def dense(k, shape):
        return jax.random.normal(k, shape, jnp.float32) * 0.02

    scale = 1.0 / (HEAD_DIM ** 0.5)
    keys = iter(jax.random.split(key, 3 + 6 * N_LAYERS))
    params = {
        "word_emb": dense(next(keys), (VOCAB, HIDDEN)),
        "pos_emb": dense(next(keys), (MAX_POS, HIDDEN)),
        "tok_type_emb": dense(next(keys), (2, HIDDEN)),
        "emb_ln_g": jnp.ones((1, HIDDEN), jnp.float32),
        "emb_ln_b": jnp.zeros((1, HIDDEN), jnp.float32),
    }
    # NOTE: freeze_model_layers only toggles requires_grad (training concern); it does not
    # change the forward pass, so nothing to do here.
    wqkv, wo, w1, w2 = [], [], [], []
    for _ in range(N_LAYERS):
        wq = dense(next(keys), (HIDDEN, HIDDEN)) * scale          # fold softmax scale into Q
        wk = dense(next(keys), (HIDDEN, HIDDEN))
        wv = dense(next(keys), (HIDDEN, HIDDEN))
        wqkv.append(jnp.concatenate([wq, wk, wv], axis=1))        # fused QKV weight [H, 3H]
        wo.append(dense(next(keys), (HIDDEN, HIDDEN)).reshape(N_HEADS, HEAD_DIM, HIDDEN))
        w1.append(dense(next(keys), (HIDDEN, FFN)))
        w2.append(dense(next(keys), (FFN, HIDDEN)))
    params.update({
        "wqkv": jnp.stack(wqkv).astype(jnp.bfloat16),             # [L, H, 3H]
        # Q bias columns would also carry the folded scale; biases are zero here.
        "bqkv": jnp.zeros((N_LAYERS, 1, 3 * HIDDEN), jnp.float32),
        "wo": jnp.stack(wo).astype(jnp.bfloat16),                 # [L, NH, dh, H]
        "bo": jnp.zeros((N_LAYERS, 1, HIDDEN), jnp.float32),
        "ln1_g": jnp.ones((N_LAYERS, 1, HIDDEN), jnp.float32),
        "ln1_b": jnp.zeros((N_LAYERS, 1, HIDDEN), jnp.float32),
        "w1": jnp.stack(w1).astype(jnp.bfloat16),                 # [L, H, FFN]
        "b1": jnp.zeros((N_LAYERS, 1, FFN), jnp.float32),
        "w2": jnp.stack(w2).astype(jnp.bfloat16),                 # [L, FFN, H]
        "b2": jnp.zeros((N_LAYERS, 1, HIDDEN), jnp.float32),
        "ln2_g": jnp.ones((N_LAYERS, 1, HIDDEN), jnp.float32),
        "ln2_b": jnp.zeros((N_LAYERS, 1, HIDDEN), jnp.float32),
    })
    return params


# ----------------------------- forward --------------------------------------------
def transformer_encoder_forward(params, input_ids, attention_mask):
    B, S = input_ids.shape
    P = B * N_HEADS * S
    mask_f = attention_mask.astype(jnp.float32)

    # Embedding table gathers = plain-JAX glue (no clean Pallas gather needed at this size).
    # Token-type is hard-coded to index 0 (matches calling the reference w/o token_type_ids).
    emb = (params["word_emb"][input_ids]
           + params["pos_emb"][:S][None, :, :]
           + params["tok_type_emb"][0][None, None, :])
    x = emb.reshape(B * S, HIDDEN).astype(jnp.float32)

    # Combined additive attention bias in the packed (batch*head, seq) key layout:
    # block-diagonal over (batch, head) blocks + per-key padding mask.
    key_bias = (1.0 - mask_f) * -1e9                              # [B, S]
    key_bias_packed = jnp.repeat(key_bias, N_HEADS, axis=0).reshape(1, P)
    blk = jnp.arange(P, dtype=jnp.int32) // S                     # packed (batch, head) block id
    block_ok = blk[:, None] == blk[None, :]
    attn_bias = jnp.where(block_ok, key_bias_packed, jnp.float32(-1e9))   # [P, P]

    # Masked mean pooling as a single matmul: pool_mat @ h, with mask / clamp(count) folded in.
    den = jnp.maximum(mask_f.sum(axis=1, keepdims=True), 1e-9)    # [B, 1]
    pool_mat = (jnp.eye(B, dtype=jnp.float32)[:, :, None]
                * (mask_f / den)[:, None, :]).reshape(B, B * S)   # [B, B*S]

    kernel = functools.partial(
        _encoder_kernel, batch=B, seq=S, n_heads=N_HEADS,
        head_dim=HEAD_DIM, n_layers=N_LAYERS, eps=LN_EPS)

    # One pallas_call for the whole encoder: all weights (~60 KB bf16) + activations (a few KB)
    # fit VMEM on every TPU generation; no grid needed at B=2 (single TensorCore).
    return pl.pallas_call(
        kernel,
        out_shape=jax.ShapeDtypeStruct((B, HIDDEN), jnp.float32),
    )(x, attn_bias, pool_mat,
      params["emb_ln_g"], params["emb_ln_b"],
      params["wqkv"], params["bqkv"], params["wo"], params["bo"],
      params["ln1_g"], params["ln1_b"],
      params["w1"], params["b1"], params["w2"], params["b2"],
      params["ln2_g"], params["ln2_b"])


# ----------------------------- main ------------------------------------------------
if __name__ == "__main__":
    key = jax.random.PRNGKey(0)
    pkey, ikey = jax.random.split(key)
    params = init_params(pkey)

    B, S = 2, 8
    input_ids = jax.random.randint(ikey, (B, S), 0, VOCAB, dtype=jnp.int32)
    attention_mask = jnp.array(
        [[1, 1, 1, 1, 1, 1, 1, 1],
         [1, 1, 1, 1, 1, 0, 0, 0]], dtype=jnp.int32
    )

    fwd = jax.jit(transformer_encoder_forward)
    pooled = fwd(params, input_ids, attention_mask)
    jax.block_until_ready(pooled)
    assert pooled.shape == (B, HIDDEN) and pooled.dtype == jnp.float32
    assert bool(jnp.all(jnp.isfinite(pooled)))
    print("KERNEL_OK")
</pallas_src>

<mosaic_0001>
module attributes {stable_mosaic.version = 11 : i64} {
  func.func @_encoder_kernel(%arg0: memref<16x32xf32, #tpu.memory_space<vmem>>, %arg1: memref<64x64xf32, #tpu.memory_space<vmem>>, %arg2: memref<2x16xf32, #tpu.memory_space<vmem>>, %arg3: memref<1x32xf32, #tpu.memory_space<vmem>>, %arg4: memref<1x32xf32, #tpu.memory_space<vmem>>, %arg5: memref<2x32x96xbf16, #tpu.memory_space<vmem>>, %arg6: memref<2x1x96xf32, #tpu.memory_space<vmem>>, %arg7: memref<2x4x8x32xbf16, #tpu.memory_space<vmem>>, %arg8: memref<2x1x32xf32, #tpu.memory_space<vmem>>, %arg9: memref<2x1x32xf32, #tpu.memory_space<vmem>>, %arg10: memref<2x1x32xf32, #tpu.memory_space<vmem>>, %arg11: memref<2x32x64xbf16, #tpu.memory_space<vmem>>, %arg12: memref<2x1x64xf32, #tpu.memory_space<vmem>>, %arg13: memref<2x64x32xbf16, #tpu.memory_space<vmem>>, %arg14: memref<2x1x32xf32, #tpu.memory_space<vmem>>, %arg15: memref<2x1x32xf32, #tpu.memory_space<vmem>>, %arg16: memref<2x1x32xf32, #tpu.memory_space<vmem>>, %arg17: memref<2x32xf32, #tpu.memory_space<vmem>>) attributes {dimension_semantics = [], scalar_prefetch = 0 : i64, scratch_operands = 0 : i64, tpu.core_type = #tpu.core_type<tc>} {
    %c0 = arith.constant 0 : index
    %c0_0 = arith.constant 0 : index
    %0 = vector.load %arg1[%c0, %c0_0] : memref<64x64xf32, #tpu.memory_space<vmem>>, vector<64x64xf32>
    %c0_1 = arith.constant 0 : index
    %c0_2 = arith.constant 0 : index
    %1 = vector.load %arg0[%c0_1, %c0_2] : memref<16x32xf32, #tpu.memory_space<vmem>>, vector<16x32xf32>
    %c0_3 = arith.constant 0 : index
    %c0_4 = arith.constant 0 : index
    %2 = vector.load %arg3[%c0_3, %c0_4] : memref<1x32xf32, #tpu.memory_space<vmem>>, vector<1x32xf32>
    %c0_5 = arith.constant 0 : index
    %c0_6 = arith.constant 0 : index
    %3 = vector.load %arg4[%c0_5, %c0_6] : memref<1x32xf32, #tpu.memory_space<vmem>>, vector<1x32xf32>
    %cst = arith.constant dense<0.000000e+00> : vector<16xf32>
    %4 = vector.multi_reduction <add>, %1, %cst [1] : vector<16x32xf32> to vector<16xf32>
    %5 = vector.shape_cast %4 : vector<16xf32> to vector<16x1xf32>
    %cst_7 = arith.constant 3.200000e+01 : f32
    %6 = vector.broadcast %cst_7 : f32 to vector<16x1xf32>
    %7 = arith.divf %5, %6 : vector<16x1xf32>
    %8 = vector.broadcast %7 : vector<16x1xf32> to vector<16x32xf32>
    %9 = arith.subf %1, %8 : vector<16x32xf32>
    %10 = arith.mulf %9, %9 : vector<16x32xf32>
    %cst_8 = arith.constant dense<0.000000e+00> : vector<16xf32>
    %11 = vector.multi_reduction <add>, %10, %cst_8 [1] : vector<16x32xf32> to vector<16xf32>
    %12 = vector.shape_cast %11 : vector<16xf32> to vector<16x1xf32>
    %cst_9 = arith.constant 3.200000e+01 : f32
    %13 = vector.broadcast %cst_9 : f32 to vector<16x1xf32>
    %14 = arith.divf %12, %13 : vector<16x1xf32>
    %15 = vector.broadcast %7 : vector<16x1xf32> to vector<16x32xf32>
    %16 = arith.subf %1, %15 : vector<16x32xf32>
    %cst_10 = arith.constant 9.99999996E-13 : f32
    %17 = vector.broadcast %cst_10 : f32 to vector<16x1xf32>
    %18 = arith.addf %14, %17 : vector<16x1xf32>
    %19 = math.rsqrt %18 : vector<16x1xf32>
    %20 = vector.broadcast %19 : vector<16x1xf32> to vector<16x32xf32>
    %21 = arith.mulf %16, %20 : vector<16x32xf32>
    %22 = vector.broadcast %2 : vector<1x32xf32> to vector<16x32xf32>
    %23 = arith.mulf %21, %22 : vector<16x32xf32>
    %24 = vector.broadcast %3 : vector<1x32xf32> to vector<16x32xf32>
    %25 = arith.addf %23, %24 : vector<16x32xf32>
    %26 = arith.truncf %25 : vector<16x32xf32> to vector<16x32xbf16>
    %c0_11 = arith.constant 0 : index
    %c0_12 = arith.constant 0 : index
    %c0_13 = arith.constant 0 : index
    %27 = vector.load %arg5[%c0_11, %c0_12, %c0_13] : memref<2x32x96xbf16, #tpu.memory_space<vmem>>, vector<1x32x96xbf16>
    %28 = vector.shape_cast %27 : vector<1x32x96xbf16> to vector<32x96xbf16>
    %cst_14 = arith.constant dense<0.000000e+00> : vector<16x96xf32>
    %29 = tpu.matmul %26, %28, %cst_14 {dimension_numbers = #tpu.dot_dimension_numbers<[1], [0], [0], [1], [0, 0, 1, 1], [], []>} : vector<16x32xbf16>, vector<32x96xbf16>, vector<16x96xf32> -> vector<16x96xf32>
    %c0_15 = arith.constant 0 : index
    %c0_16 = arith.constant 0 : index
    %c0_17 = arith.constant 0 : index
    %30 = vector.load %arg6[%c0_15, %c0_16, %c0_17] : memref<2x1x96xf32, #tpu.memory_space<vmem>>, vector<1x1x96xf32>
    %31 = vector.shape_cast %30 : vector<1x1x96xf32> to vector<1x96xf32>
    %32 = vector.broadcast %31 : vector<1x96xf32> to vector<16x96xf32>
    %33 = arith.addf %29, %32 : vector<16x96xf32>
    %34 = vector.extract_strided_slice %33 {offsets = [0, 0], sizes = [8, 8], strides = [1, 1]} : vector<16x96xf32> to vector<8x8xf32>
    %35 = vector.extract_strided_slice %33 {offsets = [0, 8], sizes = [8, 8], strides = [1, 1]} : vector<16x96xf32> to vector<8x8xf32>
    %36 = vector.extract_strided_slice %33 {offsets = [0, 16], sizes = [8, 8], strides = [1, 1]} : vector<16x96xf32> to vector<8x8xf32>
    %37 = vector.extract_strided_slice %33 {offsets = [0, 24], sizes = [8, 8], strides = [1, 1]} : vector<16x96xf32> to vector<8x8xf32>
    %38 = vector.extract_strided_slice %33 {offsets = [8, 0], sizes = [8, 8], strides = [1, 1]} : vector<16x96xf32> to vector<8x8xf32>
    %39 = vector.extract_strided_slice %33 {offsets = [8, 8], sizes = [8, 8], strides = [1, 1]} : vector<16x96xf32> to vector<8x8xf32>
    %40 = vector.extract_strided_slice %33 {offsets = [8, 16], sizes = [8, 8], strides = [1, 1]} : vector<16x96xf32> to vector<8x8xf32>
    %41 = vector.extract_strided_slice %33 {offsets = [8, 24], sizes = [8, 8], strides = [1, 1]} : vector<16x96xf32> to vector<8x8xf32>
    %42 = tpu.concatenate %34, %35, %36, %37, %38, %39, %40, %41 in 0 : vector<8x8xf32>, vector<8x8xf32>, vector<8x8xf32>, vector<8x8xf32>, vector<8x8xf32>, vector<8x8xf32>, vector<8x8xf32>, vector<8x8xf32> -> vector<64x8xf32>
    %43 = arith.truncf %42 : vector<64x8xf32> to vector<64x8xbf16>
    %44 = vector.extract_strided_slice %33 {offsets = [0, 32], sizes = [8, 8], strides = [1, 1]} : vector<16x96xf32> to vector<8x8xf32>
    %45 = vector.extract_strided_slice %33 {offsets = [0, 40], sizes = [8, 8], strides = [1, 1]} : vector<16x96xf32> to vector<8x8xf32>
    %46 = vector.extract_strided_slice %33 {offsets = [0, 48], sizes = [8, 8], strides = [1, 1]} : vector<16x96xf32> to vector<8x8xf32>
    %47 = vector.extract_strided_slice %33 {offsets = [0, 56], sizes = [8, 8], strides = [1, 1]} : vector<16x96xf32> to vector<8x8xf32>
    %48 = vector.extract_strided_slice %33 {offsets = [8, 32], sizes = [8, 8], strides = [1, 1]} : vector<16x96xf32> to vector<8x8xf32>
    %49 = vector.extract_strided_slice %33 {offsets = [8, 40], sizes = [8, 8], strides = [1, 1]} : vector<16x96xf32> to vector<8x8xf32>
    %50 = vector.extract_strided_slice %33 {offsets = [8, 48], sizes = [8, 8], strides = [1, 1]} : vector<16x96xf32> to vector<8x8xf32>
    %51 = vector.extract_strided_slice %33 {offsets = [8, 56], sizes = [8, 8], strides = [1, 1]} : vector<16x96xf32> to vector<8x8xf32>
    %52 = tpu.concatenate %44, %45, %46, %47, %48, %49, %50, %51 in 0 : vector<8x8xf32>, vector<8x8xf32>, vector<8x8xf32>, vector<8x8xf32>, vector<8x8xf32>, vector<8x8xf32>, vector<8x8xf32>, vector<8x8xf32> -> vector<64x8xf32>
    %53 = arith.truncf %52 : vector<64x8xf32> to vector<64x8xbf16>
    %54 = vector.extract_strided_slice %33 {offsets = [0, 64], sizes = [8, 8], strides = [1, 1]} : vector<16x96xf32> to vector<8x8xf32>
    %55 = vector.extract_strided_slice %33 {offsets = [0, 72], sizes = [8, 8], strides = [1, 1]} : vector<16x96xf32> to vector<8x8xf32>
    %56 = vector.extract_strided_slice %33 {offsets = [0, 80], sizes = [8, 8], strides = [1, 1]} : vector<16x96xf32> to vector<8x8xf32>
    %57 = vector.extract_strided_slice %33 {offsets = [0, 88], sizes = [8, 8], strides = [1, 1]} : vector<16x96xf32> to vector<8x8xf32>
    %58 = vector.extract_strided_slice %33 {offsets = [8, 64], sizes = [8, 8], strides = [1, 1]} : vector<16x96xf32> to vector<8x8xf32>
    %59 = vector.extract_strided_slice %33 {offsets = [8, 72], sizes = [8, 8], strides = [1, 1]} : vector<16x96xf32> to vector<8x8xf32>
    %60 = vector.extract_strided_slice %33 {offsets = [8, 80], sizes = [8, 8], strides = [1, 1]} : vector<16x96xf32> to vector<8x8xf32>
    %61 = vector.extract_strided_slice %33 {offsets = [8, 88], sizes = [8, 8], strides = [1, 1]} : vector<16x96xf32> to vector<8x8xf32>
    %62 = tpu.concatenate %54, %55, %56, %57, %58, %59, %60, %61 in 0 : vector<8x8xf32>, vector<8x8xf32>, vector<8x8xf32>, vector<8x8xf32>, vector<8x8xf32>, vector<8x8xf32>, vector<8x8xf32>, vector<8x8xf32> -> vector<64x8xf32>
    %63 = arith.truncf %62 : vector<64x8xf32> to vector<64x8xbf16>
    %cst_18 = arith.constant dense<0.000000e+00> : vector<64x64xf32>
    %64 = tpu.matmul %43, %53, %cst_18 {dimension_numbers = #tpu.dot_dimension_numbers<[1], [1], [0], [0], [0, 0, 1, 0], [], []>} : vector<64x8xbf16>, vector<64x8xbf16>, vector<64x64xf32> -> vector<64x64xf32>
    %65 = arith.addf %64, %0 : vector<64x64xf32>
    %cst_19 = arith.constant dense<0xFF800000> : vector<64xf32>
    %66 = vector.multi_reduction <maximumf>, %65, %cst_19 [1] : vector<64x64xf32> to vector<64xf32>
    %67 = vector.shape_cast %66 : vector<64xf32> to vector<64x1xf32>
    %68 = vector.broadcast %67 : vector<64x1xf32> to vector<64x64xf32>
    %69 = arith.subf %65, %68 : vector<64x64xf32>
    %70 = math.exp %69 : vector<64x64xf32>
    %cst_20 = arith.constant dense<0.000000e+00> : vector<64xf32>
    %71 = vector.multi_reduction <add>, %70, %cst_20 [1] : vector<64x64xf32> to vector<64xf32>
    %72 = vector.shape_cast %71 : vector<64xf32> to vector<64x1xf32>
    %73 = vector.broadcast %72 : vector<64x1xf32> to vector<64x64xf32>
    %74 = arith.divf %70, %73 : vector<64x64xf32>
    %75 = arith.truncf %74 : vector<64x64xf32> to vector<64x64xbf16>
    %cst_21 = arith.constant dense<0.000000e+00> : vector<64x8xf32>
    %76 = tpu.matmul %75, %63, %cst_21 {dimension_numbers = #tpu.dot_dimension_numbers<[1], [0], [0], [1], [0, 0, 1, 1], [], []>} : vector<64x64xbf16>, vector<64x8xbf16>, vector<64x8xf32> -> vector<64x8xf32>
    %c0_22 = arith.constant 0 : index
    %c0_23 = arith.constant 0 : index
    %c0_24 = arith.constant 0 : index
    %77 = vector.load %arg8[%c0_22, %c0_23, %c0_24] : memref<2x1x32xf32, #tpu.memory_space<vmem>>, vector<1x1x32xf32>
    %78 = vector.shape_cast %77 : vector<1x1x32xf32> to vector<1x32xf32>
    %79 = vector.extract_strided_slice %76 {offsets = [0, 0], sizes = [8, 8], strides = [1, 1]} : vector<64x8xf32> to vector<8x8xf32>
    %80 = vector.extract_strided_slice %76 {offsets = [32, 0], sizes = [8, 8], strides = [1, 1]} : vector<64x8xf32> to vector<8x8xf32>
    %81 = tpu.concatenate %79, %80 in 0 : vector<8x8xf32>, vector<8x8xf32> -> vector<16x8xf32>
    %82 = arith.truncf %81 : vector<16x8xf32> to vector<16x8xbf16>
    %c0_25 = arith.constant 0 : index
    %c0_26 = arith.constant 0 : index
    %c0_27 = arith.constant 0 : index
    %c0_28 = arith.constant 0 : index
    %83 = vector.load %arg7[%c0_25, %c0_26, %c0_27, %c0_28] : memref<2x4x8x32xbf16, #tpu.memory_space<vmem>>, vector<1x1x8x32xbf16>
    %84 = vector.shape_cast %83 : vector<1x1x8x32xbf16> to vector<8x32xbf16>
    %cst_29 = arith.constant dense<0.000000e+00> : vector<16x32xf32>
    %85 = tpu.matmul %82, %84, %cst_29 {dimension_numbers = #tpu.dot_dimension_numbers<[1], [0], [0], [1], [0, 0, 1, 1], [], []>} : vector<16x8xbf16>, vector<8x32xbf16>, vector<16x32xf32> -> vector<16x32xf32>
    %86 = vector.broadcast %78 : vector<1x32xf32> to vector<16x32xf32>
    %87 = arith.addf %86, %85 : vector<16x32xf32>
    %88 = vector.extract_strided_slice %76 {offsets = [8, 0], sizes = [8, 8], strides = [1, 1]} : vector<64x8xf32> to vector<8x8xf32>
    %89 = vector.extract_strided_slice %76 {offsets = [40, 0], sizes = [8, 8], strides = [1, 1]} : vector<64x8xf32> to vector<8x8xf32>
    %90 = tpu.concatenate %88, %89 in 0 : vector<8x8xf32>, vector<8x8xf32> -> vector<16x8xf32>
    %91 = arith.truncf %90 : vector<16x8xf32> to vector<16x8xbf16>
    %c0_30 = arith.constant 0 : index
    %c1 = arith.constant 1 : index
    %c0_31 = arith.constant 0 : index
    %c0_32 = arith.constant 0 : index
    %92 = vector.load %arg7[%c0_30, %c1, %c0_31, %c0_32] : memref<2x4x8x32xbf16, #tpu.memory_space<vmem>>, vector<1x1x8x32xbf16>
    %93 = vector.shape_cast %92 : vector<1x1x8x32xbf16> to vector<8x32xbf16>
    %cst_33 = arith.constant dense<0.000000e+00> : vector<16x32xf32>
    %94 = tpu.matmul %91, %93, %cst_33 {dimension_numbers = #tpu.dot_dimension_numbers<[1], [0], [0], [1], [0, 0, 1, 1], [], []>} : vector<16x8xbf16>, vector<8x32xbf16>, vector<16x32xf32> -> vector<16x32xf32>
    %95 = arith.addf %87, %94 : vector<16x32xf32>
    %96 = vector.extract_strided_slice %76 {offsets = [16, 0], sizes = [8, 8], strides = [1, 1]} : vector<64x8xf32> to vector<8x8xf32>
    %97 = vector.extract_strided_slice %76 {offsets = [48, 0], sizes = [8, 8], strides = [1, 1]} : vector<64x8xf32> to vector<8x8xf32>
    %98 = tpu.concatenate %96, %97 in 0 : vector<8x8xf32>, vector<8x8xf32> -> vector<16x8xf32>
    %99 = arith.truncf %98 : vector<16x8xf32> to vector<16x8xbf16>
    %c0_34 = arith.constant 0 : index
    %c2 = arith.constant 2 : index
    %c0_35 = arith.constant 0 : index
    %c0_36 = arith.constant 0 : index
    %100 = vector.load %arg7[%c0_34, %c2, %c0_35, %c0_36] : memref<2x4x8x32xbf16, #tpu.memory_space<vmem>>, vector<1x1x8x32xbf16>
    %101 = vector.shape_cast %100 : vector<1x1x8x32xbf16> to vector<8x32xbf16>
    %cst_37 = arith.constant dense<0.000000e+00> : vector<16x32xf32>
    %102 = tpu.matmul %99, %101, %cst_37 {dimension_numbers = #tpu.dot_dimension_numbers<[1], [0], [0], [1], [0, 0, 1, 1], [], []>} : vector<16x8xbf16>, vector<8x32xbf16>, vector<16x32xf32> -> vector<16x32xf32>
    %103 = arith.addf %95, %102 : vector<16x32xf32>
    %104 = vector.extract_strided_slice %76 {offsets = [24, 0], sizes = [8, 8], strides = [1, 1]} : vector<64x8xf32> to vector<8x8xf32>
    %105 = vector.extract_strided_slice %76 {offsets = [56, 0], sizes = [8, 8], strides = [1, 1]} : vector<64x8xf32> to vector<8x8xf32>
    %106 = tpu.concatenate %104, %105 in 0 : vector<8x8xf32>, vector<8x8xf32> -> vector<16x8xf32>
    %107 = arith.truncf %106 : vector<16x8xf32> to vector<16x8xbf16>
    %c0_38 = arith.constant 0 : index
    %c3 = arith.constant 3 : index
    %c0_39 = arith.constant 0 : index
    %c0_40 = arith.constant 0 : index
    %108 = vector.load %arg7[%c0_38, %c3, %c0_39, %c0_40] : memref<2x4x8x32xbf16, #tpu.memory_space<vmem>>, vector<1x1x8x32xbf16>
    %109 = vector.shape_cast %108 : vector<1x1x8x32xbf16> to vector<8x32xbf16>
    %cst_41 = arith.constant dense<0.000000e+00> : vector<16x32xf32>
    %110 = tpu.matmul %107, %109, %cst_41 {dimension_numbers = #tpu.dot_dimension_numbers<[1], [0], [0], [1], [0, 0, 1, 1], [], []>} : vector<16x8xbf16>, vector<8x32xbf16>, vector<16x32xf32> -> vector<16x32xf32>
    %111 = arith.addf %103, %110 : vector<16x32xf32>
    %112 = arith.addf %111, %25 : vector<16x32xf32>
    %c0_42 = arith.constant 0 : index
    %c0_43 = arith.constant 0 : index
    %c0_44 = arith.constant 0 : index
    %113 = vector.load %arg9[%c0_42, %c0_43, %c0_44] : memref<2x1x32xf32, #tpu.memory_space<vmem>>, vector<1x1x32xf32>
    %114 = vector.shape_cast %113 : vector<1x1x32xf32> to vector<1x32xf32>
    %c0_45 = arith.constant 0 : index
    %c0_46 = arith.constant 0 : index
    %c0_47 = arith.constant 0 : index
    %115 = vector.load %arg10[%c0_45, %c0_46, %c0_47] : memref<2x1x32xf32, #tpu.memory_space<vmem>>, vector<1x1x32xf32>
    %116 = vector.shape_cast %115 : vector<1x1x32xf32> to vector<1x32xf32>
    %cst_48 = arith.constant dense<0.000000e+00> : vector<16xf32>
    %117 = vector.multi_reduction <add>, %112, %cst_48 [1] : vector<16x32xf32> to vector<16xf32>
    %118 = vector.shape_cast %117 : vector<16xf32> to vector<16x1xf32>
    %cst_49 = arith.constant 3.200000e+01 : f32
    %119 = vector.broadcast %cst_49 : f32 to vector<16x1xf32>
    %120 = arith.divf %118, %119 : vector<16x1xf32>
    %121 = vector.broadcast %120 : vector<16x1xf32> to vector<16x32xf32>
    %122 = arith.subf %112, %121 : vector<16x32xf32>
    %123 = arith.mulf %122, %122 : vector<16x32xf32>
    %cst_50 = arith.constant dense<0.000000e+00> : vector<16xf32>
    %124 = vector.multi_reduction <add>, %123, %cst_50 [1] : vector<16x32xf32> to vector<16xf32>
    %125 = vector.shape_cast %124 : vector<16xf32> to vector<16x1xf32>
    %cst_51 = arith.constant 3.200000e+01 : f32
    %126 = vector.broadcast %cst_51 : f32 to vector<16x1xf32>
    %127 = arith.divf %125, %126 : vector<16x1xf32>
    %128 = vector.broadcast %120 : vector<16x1xf32> to vector<16x32xf32>
    %129 = arith.subf %112, %128 : vector<16x32xf32>
    %cst_52 = arith.constant 9.99999996E-13 : f32
    %130 = vector.broadcast %cst_52 : f32 to vector<16x1xf32>
    %131 = arith.addf %127, %130 : vector<16x1xf32>
    %132 = math.rsqrt %131 : vector<16x1xf32>
    %133 = vector.broadcast %132 : vector<16x1xf32> to vector<16x32xf32>
    %134 = arith.mulf %129, %133 : vector<16x32xf32>
    %135 = vector.broadcast %114 : vector<1x32xf32> to vector<16x32xf32>
    %136 = arith.mulf %134, %135 : vector<16x32xf32>
    %137 = vector.broadcast %116 : vector<1x32xf32> to vector<16x32xf32>
    %138 = arith.addf %136, %137 : vector<16x32xf32>
    %139 = arith.truncf %138 : vector<16x32xf32> to vector<16x32xbf16>
    %c0_53 = arith.constant 0 : index
    %c0_54 = arith.constant 0 : index
    %c0_55 = arith.constant 0 : index
    %140 = vector.load %arg11[%c0_53, %c0_54, %c0_55] : memref<2x32x64xbf16, #tpu.memory_space<vmem>>, vector<1x32x64xbf16>
    %141 = vector.shape_cast %140 : vector<1x32x64xbf16> to vector<32x64xbf16>
    %cst_56 = arith.constant dense<0.000000e+00> : vector<16x64xf32>
    %142 = tpu.matmul %139, %141, %cst_56 {dimension_numbers = #tpu.dot_dimension_numbers<[1], [0], [0], [1], [0, 0, 1, 1], [], []>} : vector<16x32xbf16>, vector<32x64xbf16>, vector<16x64xf32> -> vector<16x64xf32>
    %c0_57 = arith.constant 0 : index
    %c0_58 = arith.constant 0 : index
    %c0_59 = arith.constant 0 : index
    %143 = vector.load %arg12[%c0_57, %c0_58, %c0_59] : memref<2x1x64xf32, #tpu.memory_space<vmem>>, vector<1x1x64xf32>
    %144 = vector.shape_cast %143 : vector<1x1x64xf32> to vector<1x64xf32>
    %145 = vector.broadcast %144 : vector<1x64xf32> to vector<16x64xf32>
    %146 = arith.addf %142, %145 : vector<16x64xf32>
    %147 = arith.mulf %146, %146 : vector<16x64xf32>
    %148 = arith.mulf %146, %147 : vector<16x64xf32>
    %cst_60 = arith.constant 4.471500e-02 : f32
    %149 = vector.broadcast %cst_60 : f32 to vector<16x64xf32>
    %150 = arith.mulf %149, %148 : vector<16x64xf32>
    %151 = arith.addf %146, %150 : vector<16x64xf32>
    %cst_61 = arith.constant 0.797884583 : f32
    %152 = vector.broadcast %cst_61 : f32 to vector<16x64xf32>
    %153 = arith.mulf %152, %151 : vector<16x64xf32>
    %154 = math.tanh %153 : vector<16x64xf32>
    %cst_62 = arith.constant 1.000000e+00 : f32
    %155 = vector.broadcast %cst_62 : f32 to vector<16x64xf32>
    %156 = arith.addf %155, %154 : vector<16x64xf32>
    %cst_63 = arith.constant 5.000000e-01 : f32
    %157 = vector.broadcast %cst_63 : f32 to vector<16x64xf32>
    %158 = arith.mulf %157, %156 : vector<16x64xf32>
    %159 = arith.mulf %146, %158 : vector<16x64xf32>
    %160 = arith.truncf %159 : vector<16x64xf32> to vector<16x64xbf16>
    %c0_64 = arith.constant 0 : index
    %c0_65 = arith.constant 0 : index
    %c0_66 = arith.constant 0 : index
    %161 = vector.load %arg13[%c0_64, %c0_65, %c0_66] : memref<2x64x32xbf16, #tpu.memory_space<vmem>>, vector<1x64x32xbf16>
    %162 = vector.shape_cast %161 : vector<1x64x32xbf16> to vector<64x32xbf16>
    %cst_67 = arith.constant dense<0.000000e+00> : vector<16x32xf32>
    %163 = tpu.matmul %160, %162, %cst_67 {dimension_numbers = #tpu.dot_dimension_numbers<[1], [0], [0], [1], [0, 0, 1, 1], [], []>} : vector<16x64xbf16>, vector<64x32xbf16>, vector<16x32xf32> -> vector<16x32xf32>
    %c0_68 = arith.constant 0 : index
    %c0_69 = arith.constant 0 : index
    %c0_70 = arith.constant 0 : index
    %164 = vector.load %arg14[%c0_68, %c0_69, %c0_70] : memref<2x1x32xf32, #tpu.memory_space<vmem>>, vector<1x1x32xf32>
    %165 = vector.shape_cast %164 : vector<1x1x32xf32> to vector<1x32xf32>
    %166 = vector.broadcast %165 : vector<1x32xf32> to vector<16x32xf32>
    %167 = arith.addf %163, %166 : vector<16x32xf32>
    %168 = arith.addf %167, %138 : vector<16x32xf32>
    %c0_71 = arith.constant 0 : index
    %c0_72 = arith.constant 0 : index
    %c0_73 = arith.constant 0 : index
    %169 = vector.load %arg15[%c0_71, %c0_72, %c0_73] : memref<2x1x32xf32, #tpu.memory_space<vmem>>, vector<1x1x32xf32>
    %170 = vector.shape_cast %169 : vector<1x1x32xf32> to vector<1x32xf32>
    %c0_74 = arith.constant 0 : index
    %c0_75 = arith.constant 0 : index
    %c0_76 = arith.constant 0 : index
    %171 = vector.load %arg16[%c0_74, %c0_75, %c0_76] : memref<2x1x32xf32, #tpu.memory_space<vmem>>, vector<1x1x32xf32>
    %172 = vector.shape_cast %171 : vector<1x1x32xf32> to vector<1x32xf32>
    %cst_77 = arith.constant dense<0.000000e+00> : vector<16xf32>
    %173 = vector.multi_reduction <add>, %168, %cst_77 [1] : vector<16x32xf32> to vector<16xf32>
    %174 = vector.shape_cast %173 : vector<16xf32> to vector<16x1xf32>
    %cst_78 = arith.constant 3.200000e+01 : f32
    %175 = vector.broadcast %cst_78 : f32 to vector<16x1xf32>
    %176 = arith.divf %174, %175 : vector<16x1xf32>
    %177 = vector.broadcast %176 : vector<16x1xf32> to vector<16x32xf32>
    %178 = arith.subf %168, %177 : vector<16x32xf32>
    %179 = arith.mulf %178, %178 : vector<16x32xf32>
    %cst_79 = arith.constant dense<0.000000e+00> : vector<16xf32>
    %180 = vector.multi_reduction <add>, %179, %cst_79 [1] : vector<16x32xf32> to vector<16xf32>
    %181 = vector.shape_cast %180 : vector<16xf32> to vector<16x1xf32>
    %cst_80 = arith.constant 3.200000e+01 : f32
    %182 = vector.broadcast %cst_80 : f32 to vector<16x1xf32>
    %183 = arith.divf %181, %182 : vector<16x1xf32>
    %184 = vector.broadcast %176 : vector<16x1xf32> to vector<16x32xf32>
    %185 = arith.subf %168, %184 : vector<16x32xf32>
    %cst_81 = arith.constant 9.99999996E-13 : f32
    %186 = vector.broadcast %cst_81 : f32 to vector<16x1xf32>
    %187 = arith.addf %183, %186 : vector<16x1xf32>
    %188 = math.rsqrt %187 : vector<16x1xf32>
    %189 = vector.broadcast %188 : vector<16x1xf32> to vector<16x32xf32>
    %190 = arith.mulf %185, %189 : vector<16x32xf32>
    %191 = vector.broadcast %170 : vector<1x32xf32> to vector<16x32xf32>
    %192 = arith.mulf %190, %191 : vector<16x32xf32>
    %193 = vector.broadcast %172 : vector<1x32xf32> to vector<16x32xf32>
    %194 = arith.addf %192, %193 : vector<16x32xf32>
    %195 = arith.truncf %194 : vector<16x32xf32> to vector<16x32xbf16>
    %c1_82 = arith.constant 1 : index
    %c0_83 = arith.constant 0 : index
    %c0_84 = arith.constant 0 : index
    %196 = vector.load %arg5[%c1_82, %c0_83, %c0_84] : memref<2x32x96xbf16, #tpu.memory_space<vmem>>, vector<1x32x96xbf16>
    %197 = vector.shape_cast %196 : vector<1x32x96xbf16> to vector<32x96xbf16>
    %cst_85 = arith.constant dense<0.000000e+00> : vector<16x96xf32>
    %198 = tpu.matmul %195, %197, %cst_85 {dimension_numbers = #tpu.dot_dimension_numbers<[1], [0], [0], [1], [0, 0, 1, 1], [], []>} : vector<16x32xbf16>, vector<32x96xbf16>, vector<16x96xf32> -> vector<16x96xf32>
    %c1_86 = arith.constant 1 : index
    %c0_87 = arith.constant 0 : index
    %c0_88 = arith.constant 0 : index
    %199 = vector.load %arg6[%c1_86, %c0_87, %c0_88] : memref<2x1x96xf32, #tpu.memory_space<vmem>>, vector<1x1x96xf32>
    %200 = vector.shape_cast %199 : vector<1x1x96xf32> to vector<1x96xf32>
    %201 = vector.broadcast %200 : vector<1x96xf32> to vector<16x96xf32>
    %202 = arith.addf %198, %201 : vector<16x96xf32>
    %203 = vector.extract_strided_slice %202 {offsets = [0, 0], sizes = [8, 8], strides = [1, 1]} : vector<16x96xf32> to vector<8x8xf32>
    %204 = vector.extract_strided_slice %202 {offsets = [0, 8], sizes = [8, 8], strides = [1, 1]} : vector<16x96xf32> to vector<8x8xf32>
    %205 = vector.extract_strided_slice %202 {offsets = [0, 16], sizes = [8, 8], strides = [1, 1]} : vector<16x96xf32> to vector<8x8xf32>
    %206 = vector.extract_strided_slice %202 {offsets = [0, 24], sizes = [8, 8], strides = [1, 1]} : vector<16x96xf32> to vector<8x8xf32>
    %207 = vector.extract_strided_slice %202 {offsets = [8, 0], sizes = [8, 8], strides = [1, 1]} : vector<16x96xf32> to vector<8x8xf32>
    %208 = vector.extract_strided_slice %202 {offsets = [8, 8], sizes = [8, 8], strides = [1, 1]} : vector<16x96xf32> to vector<8x8xf32>
    %209 = vector.extract_strided_slice %202 {offsets = [8, 16], sizes = [8, 8], strides = [1, 1]} : vector<16x96xf32> to vector<8x8xf32>
    %210 = vector.extract_strided_slice %202 {offsets = [8, 24], sizes = [8, 8], strides = [1, 1]} : vector<16x96xf32> to vector<8x8xf32>
    %211 = tpu.concatenate %203, %204, %205, %206, %207, %208, %209, %210 in 0 : vector<8x8xf32>, vector<8x8xf32>, vector<8x8xf32>, vector<8x8xf32>, vector<8x8xf32>, vector<8x8xf32>, vector<8x8xf32>, vector<8x8xf32> -> vector<64x8xf32>
    %212 = arith.truncf %211 : vector<64x8xf32> to vector<64x8xbf16>
    %213 = vector.extract_strided_slice %202 {offsets = [0, 32], sizes = [8, 8], strides = [1, 1]} : vector<16x96xf32> to vector<8x8xf32>
    %214 = vector.extract_strided_slice %202 {offsets = [0, 40], sizes = [8, 8], strides = [1, 1]} : vector<16x96xf32> to vector<8x8xf32>
    %215 = vector.extract_strided_slice %202 {offsets = [0, 48], sizes = [8, 8], strides = [1, 1]} : vector<16x96xf32> to vector<8x8xf32>
    %216 = vector.extract_strided_slice %202 {offsets = [0, 56], sizes = [8, 8], strides = [1, 1]} : vector<16x96xf32> to vector<8x8xf32>
    %217 = vector.extract_strided_slice %202 {offsets = [8, 32], sizes = [8, 8], strides = [1, 1]} : vector<16x96xf32> to vector<8x8xf32>
    %218 = vector.extract_strided_slice %202 {offsets = [8, 40], sizes = [8, 8], strides = [1, 1]} : vector<16x96xf32> to vector<8x8xf32>
    %219 = vector.extract_strided_slice %202 {offsets = [8, 48], sizes = [8, 8], strides = [1, 1]} : vector<16x96xf32> to vector<8x8xf32>
    %220 = vector.extract_strided_slice %202 {offsets = [8, 56], sizes = [8, 8], strides = [1, 1]} : vector<16x96xf32> to vector<8x8xf32>
    %221 = tpu.concatenate %213, %214, %215, %216, %217, %218, %219, %220 in 0 : vector<8x8xf32>, vector<8x8xf32>, vector<8x8xf32>, vector<8x8xf32>, vector<8x8xf32>, vector<8x8xf32>, vector<8x8xf32>, vector<8x8xf32> -> vector<64x8xf32>
    %222 = arith.truncf %221 : vector<64x8xf32> to vector<64x8xbf16>
    %223 = vector.extract_strided_slice %202 {offsets = [0, 64], sizes = [8, 8], strides = [1, 1]} : vector<16x96xf32> to vector<8x8xf32>
    %224 = vector.extract_strided_slice %202 {offsets = [0, 72], sizes = [8, 8], strides = [1, 1]} : vector<16x96xf32> to vector<8x8xf32>
    %225 = vector.extract_strided_slice %202 {offsets = [0, 80], sizes = [8, 8], strides = [1, 1]} : vector<16x96xf32> to vector<8x8xf32>
    %226 = vector.extract_strided_slice %202 {offsets = [0, 88], sizes = [8, 8], strides = [1, 1]} : vector<16x96xf32> to vector<8x8xf32>
    %227 = vector.extract_strided_slice %202 {offsets = [8, 64], sizes = [8, 8], strides = [1, 1]} : vector<16x96xf32> to vector<8x8xf32>
    %228 = vector.extract_strided_slice %202 {offsets = [8, 72], sizes = [8, 8], strides = [1, 1]} : vector<16x96xf32> to vector<8x8xf32>
    %229 = vector.extract_strided_slice %202 {offsets = [8, 80], sizes = [8, 8], strides = [1, 1]} : vector<16x96xf32> to vector<8x8xf32>
    %230 = vector.extract_strided_slice %202 {offsets = [8, 88], sizes = [8, 8], strides = [1, 1]} : vector<16x96xf32> to vector<8x8xf32>
    %231 = tpu.concatenate %223, %224, %225, %226, %227, %228, %229, %230 in 0 : vector<8x8xf32>, vector<8x8xf32>, vector<8x8xf32>, vector<8x8xf32>, vector<8x8xf32>, vector<8x8xf32>, vector<8x8xf32>, vector<8x8xf32> -> vector<64x8xf32>
    %232 = arith.truncf %231 : vector<64x8xf32> to vector<64x8xbf16>
    %cst_89 = arith.constant dense<0.000000e+00> : vector<64x64xf32>
    %233 = tpu.matmul %212, %222, %cst_89 {dimension_numbers = #tpu.dot_dimension_numbers<[1], [1], [0], [0], [0, 0, 1, 0], [], []>} : vector<64x8xbf16>, vector<64x8xbf16>, vector<64x64xf32> -> vector<64x64xf32>
    %234 = arith.addf %233, %0 : vector<64x64xf32>
    %cst_90 = arith.constant dense<0xFF800000> : vector<64xf32>
    %235 = vector.multi_reduction <maximumf>, %234, %cst_90 [1] : vector<64x64xf32> to vector<64xf32>
    %236 = vector.shape_cast %235 : vector<64xf32> to vector<64x1xf32>
    %237 = vector.broadcast %236 : vector<64x1xf32> to vector<64x64xf32>
    %238 = arith.subf %234, %237 : vector<64x64xf32>
    %239 = math.exp %238 : vector<64x64xf32>
    %cst_91 = arith.constant dense<0.000000e+00> : vector<64xf32>
    %240 = vector.multi_reduction <add>, %239, %cst_91 [1] : vector<64x64xf32> to vector<64xf32>
    %241 = vector.shape_cast %240 : vector<64xf32> to vector<64x1xf32>
    %242 = vector.broadcast %241 : vector<64x1xf32> to vector<64x64xf32>
    %243 = arith.divf %239, %242 : vector<64x64xf32>
    %244 = arith.truncf %243 : vector<64x64xf32> to vector<64x64xbf16>
    %cst_92 = arith.constant dense<0.000000e+00> : vector<64x8xf32>
    %245 = tpu.matmul %244, %232, %cst_92 {dimension_numbers = #tpu.dot_dimension_numbers<[1], [0], [0], [1], [0, 0, 1, 1], [], []>} : vector<64x64xbf16>, vector<64x8xbf16>, vector<64x8xf32> -> vector<64x8xf32>
    %c1_93 = arith.constant 1 : index
    %c0_94 = arith.constant 0 : index
    %c0_95 = arith.constant 0 : index
    %246 = vector.load %arg8[%c1_93, %c0_94, %c0_95] : memref<2x1x32xf32, #tpu.memory_space<vmem>>, vector<1x1x32xf32>
    %247 = vector.shape_cast %246 : vector<1x1x32xf32> to vector<1x32xf32>
    %248 = vector.extract_strided_slice %245 {offsets = [0, 0], sizes = [8, 8], strides = [1, 1]} : vector<64x8xf32> to vector<8x8xf32>
    %249 = vector.extract_strided_slice %245 {offsets = [32, 0], sizes = [8, 8], strides = [1, 1]} : vector<64x8xf32> to vector<8x8xf32>
    %250 = tpu.concatenate %248, %249 in 0 : vector<8x8xf32>, vector<8x8xf32> -> vector<16x8xf32>
    %251 = arith.truncf %250 : vector<16x8xf32> to vector<16x8xbf16>
    %c1_96 = arith.constant 1 : index
    %c0_97 = arith.constant 0 : index
    %c0_98 = arith.constant 0 : index
    %c0_99 = arith.constant 0 : index
    %252 = vector.load %arg7[%c1_96, %c0_97, %c0_98, %c0_99] : memref<2x4x8x32xbf16, #tpu.memory_space<vmem>>, vector<1x1x8x32xbf16>
    %253 = vector.shape_cast %252 : vector<1x1x8x32xbf16> to vector<8x32xbf16>
    %cst_100 = arith.constant dense<0.000000e+00> : vector<16x32xf32>
    %254 = tpu.matmul %251, %253, %cst_100 {dimension_numbers = #tpu.dot_dimension_numbers<[1], [0], [0], [1], [0, 0, 1, 1], [], []>} : vector<16x8xbf16>, vector<8x32xbf16>, vector<16x32xf32> -> vector<16x32xf32>
    %255 = vector.broadcast %247 : vector<1x32xf32> to vector<16x32xf32>
    %256 = arith.addf %255, %254 : vector<16x32xf32>
    %257 = vector.extract_strided_slice %245 {offsets = [8, 0], sizes = [8, 8], strides = [1, 1]} : vector<64x8xf32> to vector<8x8xf32>
    %258 = vector.extract_strided_slice %245 {offsets = [40, 0], sizes = [8, 8], strides = [1, 1]} : vector<64x8xf32> to vector<8x8xf32>
    %259 = tpu.concatenate %257, %258 in 0 : vector<8x8xf32>, vector<8x8xf32> -> vector<16x8xf32>
    %260 = arith.truncf %259 : vector<16x8xf32> to vector<16x8xbf16>
    %c1_101 = arith.constant 1 : index
    %c1_102 = arith.constant 1 : index
    %c0_103 = arith.constant 0 : index
    %c0_104 = arith.constant 0 : index
    %261 = vector.load %arg7[%c1_101, %c1_102, %c0_103, %c0_104] : memref<2x4x8x32xbf16, #tpu.memory_space<vmem>>, vector<1x1x8x32xbf16>
    %262 = vector.shape_cast %261 : vector<1x1x8x32xbf16> to vector<8x32xbf16>
    %cst_105 = arith.constant dense<0.000000e+00> : vector<16x32xf32>
    %263 = tpu.matmul %260, %262, %cst_105 {dimension_numbers = #tpu.dot_dimension_numbers<[1], [0], [0], [1], [0, 0, 1, 1], [], []>} : vector<16x8xbf16>, vector<8x32xbf16>, vector<16x32xf32> -> vector<16x32xf32>
    %264 = arith.addf %256, %263 : vector<16x32xf32>
    %265 = vector.extract_strided_slice %245 {offsets = [16, 0], sizes = [8, 8], strides = [1, 1]} : vector<64x8xf32> to vector<8x8xf32>
    %266 = vector.extract_strided_slice %245 {offsets = [48, 0], sizes = [8, 8], strides = [1, 1]} : vector<64x8xf32> to vector<8x8xf32>
    %267 = tpu.concatenate %265, %266 in 0 : vector<8x8xf32>, vector<8x8xf32> -> vector<16x8xf32>
    %268 = arith.truncf %267 : vector<16x8xf32> to vector<16x8xbf16>
    %c1_106 = arith.constant 1 : index
    %c2_107 = arith.constant 2 : index
    %c0_108 = arith.constant 0 : index
    %c0_109 = arith.constant 0 : index
    %269 = vector.load %arg7[%c1_106, %c2_107, %c0_108, %c0_109] : memref<2x4x8x32xbf16, #tpu.memory_space<vmem>>, vector<1x1x8x32xbf16>
    %270 = vector.shape_cast %269 : vector<1x1x8x32xbf16> to vector<8x32xbf16>
    %cst_110 = arith.constant dense<0.000000e+00> : vector<16x32xf32>
    %271 = tpu.matmul %268, %270, %cst_110 {dimension_numbers = #tpu.dot_dimension_numbers<[1], [0], [0], [1], [0, 0, 1, 1], [], []>} : vector<16x8xbf16>, vector<8x32xbf16>, vector<16x32xf32> -> vector<16x32xf32>
    %272 = arith.addf %264, %271 : vector<16x32xf32>
    %273 = vector.extract_strided_slice %245 {offsets = [24, 0], sizes = [8, 8], strides = [1, 1]} : vector<64x8xf32> to vector<8x8xf32>
    %274 = vector.extract_strided_slice %245 {offsets = [56, 0], sizes = [8, 8], strides = [1, 1]} : vector<64x8xf32> to vector<8x8xf32>
    %275 = tpu.concatenate %273, %274 in 0 : vector<8x8xf32>, vector<8x8xf32> -> vector<16x8xf32>
    %276 = arith.truncf %275 : vector<16x8xf32> to vector<16x8xbf16>
    %c1_111 = arith.constant 1 : index
    %c3_112 = arith.constant 3 : index
    %c0_113 = arith.constant 0 : index
    %c0_114 = arith.constant 0 : index
    %277 = vector.load %arg7[%c1_111, %c3_112, %c0_113, %c0_114] : memref<2x4x8x32xbf16, #tpu.memory_space<vmem>>, vector<1x1x8x32xbf16>
    %278 = vector.shape_cast %277 : vector<1x1x8x32xbf16> to vector<8x32xbf16>
    %cst_115 = arith.constant dense<0.000000e+00> : vector<16x32xf32>
    %279 = tpu.matmul %276, %278, %cst_115 {dimension_numbers = #tpu.dot_dimension_numbers<[1], [0], [0], [1], [0, 0, 1, 1], [], []>} : vector<16x8xbf16>, vector<8x32xbf16>, vector<16x32xf32> -> vector<16x32xf32>
    %280 = arith.addf %272, %279 : vector<16x32xf32>
    %281 = arith.addf %280, %194 : vector<16x32xf32>
    %c1_116 = arith.constant 1 : index
    %c0_117 = arith.constant 0 : index
    %c0_118 = arith.constant 0 : index
    %282 = vector.load %arg9[%c1_116, %c0_117, %c0_118] : memref<2x1x32xf32, #tpu.memory_space<vmem>>, vector<1x1x32xf32>
    %283 = vector.shape_cast %282 : vector<1x1x32xf32> to vector<1x32xf32>
    %c1_119 = arith.constant 1 : index
    %c0_120 = arith.constant 0 : index
    %c0_121 = arith.constant 0 : index
    %284 = vector.load %arg10[%c1_119, %c0_120, %c0_121] : memref<2x1x32xf32, #tpu.memory_space<vmem>>, vector<1x1x32xf32>
    %285 = vector.shape_cast %284 : vector<1x1x32xf32> to vector<1x32xf32>
    %cst_122 = arith.constant dense<0.000000e+00> : vector<16xf32>
    %286 = vector.multi_reduction <add>, %281, %cst_122 [1] : vector<16x32xf32> to vector<16xf32>
    %287 = vector.shape_cast %286 : vector<16xf32> to vector<16x1xf32>
    %cst_123 = arith.constant 3.200000e+01 : f32
    %288 = vector.broadcast %cst_123 : f32 to vector<16x1xf32>
    %289 = arith.divf %287, %288 : vector<16x1xf32>
    %290 = vector.broadcast %289 : vector<16x1xf32> to vector<16x32xf32>
    %291 = arith.subf %281, %290 : vector<16x32xf32>
    %292 = arith.mulf %291, %291 : vector<16x32xf32>
    %cst_124 = arith.constant dense<0.000000e+00> : vector<16xf32>
    %293 = vector.multi_reduction <add>, %292, %cst_124 [1] : vector<16x32xf32> to vector<16xf32>
    %294 = vector.shape_cast %293 : vector<16xf32> to vector<16x1xf32>
    %cst_125 = arith.constant 3.200000e+01 : f32
    %295 = vector.broadcast %cst_125 : f32 to vector<16x1xf32>
    %296 = arith.divf %294, %295 : vector<16x1xf32>
    %297 = vector.broadcast %289 : vector<16x1xf32> to vector<16x32xf32>
    %298 = arith.subf %281, %297 : vector<16x32xf32>
    %cst_126 = arith.constant 9.99999996E-13 : f32
    %299 = vector.broadcast %cst_126 : f32 to vector<16x1xf32>
    %300 = arith.addf %296, %299 : vector<16x1xf32>
    %301 = math.rsqrt %300 : vector<16x1xf32>
    %302 = vector.broadcast %301 : vector<16x1xf32> to vector<16x32xf32>
    %303 = arith.mulf %298, %302 : vector<16x32xf32>
    %304 = vector.broadcast %283 : vector<1x32xf32> to vector<16x32xf32>
    %305 = arith.mulf %303, %304 : vector<16x32xf32>
    %306 = vector.broadcast %285 : vector<1x32xf32> to vector<16x32xf32>
    %307 = arith.addf %305, %306 : vector<16x32xf32>
    %308 = arith.truncf %307 : vector<16x32xf32> to vector<16x32xbf16>
    %c1_127 = arith.constant 1 : index
    %c0_128 = arith.constant 0 : index
    %c0_129 = arith.constant 0 : index
    %309 = vector.load %arg11[%c1_127, %c0_128, %c0_129] : memref<2x32x64xbf16, #tpu.memory_space<vmem>>, vector<1x32x64xbf16>
    %310 = vector.shape_cast %309 : vector<1x32x64xbf16> to vector<32x64xbf16>
    %cst_130 = arith.constant dense<0.000000e+00> : vector<16x64xf32>
    %311 = tpu.matmul %308, %310, %cst_130 {dimension_numbers = #tpu.dot_dimension_numbers<[1], [0], [0], [1], [0, 0, 1, 1], [], []>} : vector<16x32xbf16>, vector<32x64xbf16>, vector<16x64xf32> -> vector<16x64xf32>
    %c1_131 = arith.constant 1 : index
    %c0_132 = arith.constant 0 : index
    %c0_133 = arith.constant 0 : index
    %312 = vector.load %arg12[%c1_131, %c0_132, %c0_133] : memref<2x1x64xf32, #tpu.memory_space<vmem>>, vector<1x1x64xf32>
    %313 = vector.shape_cast %312 : vector<1x1x64xf32> to vector<1x64xf32>
    %314 = vector.broadcast %313 : vector<1x64xf32> to vector<16x64xf32>
    %315 = arith.addf %311, %314 : vector<16x64xf32>
    %316 = arith.mulf %315, %315 : vector<16x64xf32>
    %317 = arith.mulf %315, %316 : vector<16x64xf32>
    %cst_134 = arith.constant 4.471500e-02 : f32
    %318 = vector.broadcast %cst_134 : f32 to vector<16x64xf32>
    %319 = arith.mulf %318, %317 : vector<16x64xf32>
    %320 = arith.addf %315, %319 : vector<16x64xf32>
    %cst_135 = arith.constant 0.797884583 : f32
    %321 = vector.broadcast %cst_135 : f32 to vector<16x64xf32>
    %322 = arith.mulf %321, %320 : vector<16x64xf32>
    %323 = math.tanh %322 : vector<16x64xf32>
    %cst_136 = arith.constant 1.000000e+00 : f32
    %324 = vector.broadcast %cst_136 : f32 to vector<16x64xf32>
    %325 = arith.addf %324, %323 : vector<16x64xf32>
    %cst_137 = arith.constant 5.000000e-01 : f32
    %326 = vector.broadcast %cst_137 : f32 to vector<16x64xf32>
    %327 = arith.mulf %326, %325 : vector<16x64xf32>
    %328 = arith.mulf %315, %327 : vector<16x64xf32>
    %329 = arith.truncf %328 : vector<16x64xf32> to vector<16x64xbf16>
    %c1_138 = arith.constant 1 : index
    %c0_139 = arith.constant 0 : index
    %c0_140 = arith.constant 0 : index
    %330 = vector.load %arg13[%c1_138, %c0_139, %c0_140] : memref<2x64x32xbf16, #tpu.memory_space<vmem>>, vector<1x64x32xbf16>
    %331 = vector.shape_cast %330 : vector<1x64x32xbf16> to vector<64x32xbf16>
    %cst_141 = arith.constant dense<0.000000e+00> : vector<16x32xf32>
    %332 = tpu.matmul %329, %331, %cst_141 {dimension_numbers = #tpu.dot_dimension_numbers<[1], [0], [0], [1], [0, 0, 1, 1], [], []>} : vector<16x64xbf16>, vector<64x32xbf16>, vector<16x32xf32> -> vector<16x32xf32>
    %c1_142 = arith.constant 1 : index
    %c0_143 = arith.constant 0 : index
    %c0_144 = arith.constant 0 : index
    %333 = vector.load %arg14[%c1_142, %c0_143, %c0_144] : memref<2x1x32xf32, #tpu.memory_space<vmem>>, vector<1x1x32xf32>
    %334 = vector.shape_cast %333 : vector<1x1x32xf32> to vector<1x32xf32>
    %335 = vector.broadcast %334 : vector<1x32xf32> to vector<16x32xf32>
    %336 = arith.addf %332, %335 : vector<16x32xf32>
    %337 = arith.addf %336, %307 : vector<16x32xf32>
    %c1_145 = arith.constant 1 : index
    %c0_146 = arith.constant 0 : index
    %c0_147 = arith.constant 0 : index
    %338 = vector.load %arg15[%c1_145, %c0_146, %c0_147] : memref<2x1x32xf32, #tpu.memory_space<vmem>>, vector<1x1x32xf32>
    %339 = vector.shape_cast %338 : vector<1x1x32xf32> to vector<1x32xf32>
    %c1_148 = arith.constant 1 : index
    %c0_149 = arith.constant 0 : index
    %c0_150 = arith.constant 0 : index
    %340 = vector.load %arg16[%c1_148, %c0_149, %c0_150] : memref<2x1x32xf32, #tpu.memory_space<vmem>>, vector<1x1x32xf32>
    %341 = vector.shape_cast %340 : vector<1x1x32xf32> to vector<1x32xf32>
    %cst_151 = arith.constant dense<0.000000e+00> : vector<16xf32>
    %342 = vector.multi_reduction <add>, %337, %cst_151 [1] : vector<16x32xf32> to vector<16xf32>
    %343 = vector.shape_cast %342 : vector<16xf32> to vector<16x1xf32>
    %cst_152 = arith.constant 3.200000e+01 : f32
    %344 = vector.broadcast %cst_152 : f32 to vector<16x1xf32>
    %345 = arith.divf %343, %344 : vector<16x1xf32>
    %346 = vector.broadcast %345 : vector<16x1xf32> to vector<16x32xf32>
    %347 = arith.subf %337, %346 : vector<16x32xf32>
    %348 = arith.mulf %347, %347 : vector<16x32xf32>
    %cst_153 = arith.constant dense<0.000000e+00> : vector<16xf32>
    %349 = vector.multi_reduction <add>, %348, %cst_153 [1] : vector<16x32xf32> to vector<16xf32>
    %350 = vector.shape_cast %349 : vector<16xf32> to vector<16x1xf32>
    %cst_154 = arith.constant 3.200000e+01 : f32
    %351 = vector.broadcast %cst_154 : f32 to vector<16x1xf32>
    %352 = arith.divf %350, %351 : vector<16x1xf32>
    %353 = vector.broadcast %345 : vector<16x1xf32> to vector<16x32xf32>
    %354 = arith.subf %337, %353 : vector<16x32xf32>
    %cst_155 = arith.constant 9.99999996E-13 : f32
    %355 = vector.broadcast %cst_155 : f32 to vector<16x1xf32>
    %356 = arith.addf %352, %355 : vector<16x1xf32>
    %357 = math.rsqrt %356 : vector<16x1xf32>
    %358 = vector.broadcast %357 : vector<16x1xf32> to vector<16x32xf32>
    %359 = arith.mulf %354, %358 : vector<16x32xf32>
    %360 = vector.broadcast %339 : vector<1x32xf32> to vector<16x32xf32>
    %361 = arith.mulf %359, %360 : vector<16x32xf32>
    %362 = vector.broadcast %341 : vector<1x32xf32> to vector<16x32xf32>
    %363 = arith.addf %361, %362 : vector<16x32xf32>
    %c0_156 = arith.constant 0 : index
    %c0_157 = arith.constant 0 : index
    %364 = vector.load %arg2[%c0_156, %c0_157] : memref<2x16xf32, #tpu.memory_space<vmem>>, vector<2x16xf32>
    %cst_158 = arith.constant dense<0.000000e+00> : vector<2x32xf32>
    %365 = tpu.matmul %364, %363, %cst_158 {dimension_numbers = #tpu.dot_dimension_numbers<[1], [0], [0], [1], [0, 0, 1, 1], [], []>} : vector<2x16xf32>, vector<16x32xf32>, vector<2x32xf32> -> vector<2x32xf32>
    %c0_159 = arith.constant 0 : index
    %c0_160 = arith.constant 0 : index
    %366 = vector.load %arg17[%c0_159, %c0_160] : memref<2x32xf32, #tpu.memory_space<vmem>>, vector<2x32xf32>
    tpu.vector_store %arg17[%c0_159, %c0_160], %365 {strides = array<i32>} : memref<2x32xf32, #tpu.memory_space<vmem>>, vector<2x32xf32>,
    return
  }
}

</mosaic_0001>

<llo_original>
// kernel: transformer_encoder_forward.1
$region0: #{transformer_encoder_forward.1}
  #allocation0 [shape = 'u32[]', space=smem, size = 0x4, offset = 0x4, fixed_abs, tag = 'smem constant byte address 0x4 - core index']
  #allocation1 [shape = 'u32[72,128]{1,0:T(1,128)}', space=vmem, size = 0x9000, scoped, tag = 'internal scratch']
  %s0 = inlined_call_operand.vmem [shape: f32[16,32], index: 0, kind: input, shape index: {}]
  %s1 = inlined_call_operand.vmem [shape: f32[64,64], index: 1, kind: input, shape index: {}]
  %s2 = inlined_call_operand.vmem [shape: f32[2,16], index: 2, kind: input, shape index: {}]
  %s3 = inlined_call_operand.vmem [shape: f32[1,32], index: 3, kind: input, shape index: {}]
  %s4 = inlined_call_operand.vmem [shape: f32[1,32], index: 4, kind: input, shape index: {}]
  %s5 = inlined_call_operand.vmem [shape: bf16[2,32,96], index: 5, kind: input, shape index: {}]
  %s6 = inlined_call_operand.vmem [shape: f32[2,1,96], index: 6, kind: input, shape index: {}]
  %s7 = inlined_call_operand.vmem [shape: bf16[2,4,8,32], index: 7, kind: input, shape index: {}]
  %s8 = inlined_call_operand.vmem [shape: f32[2,1,32], index: 8, kind: input, shape index: {}]
  %s9 = inlined_call_operand.vmem [shape: f32[2,1,32], index: 9, kind: input, shape index: {}]
  %s10 = inlined_call_operand.vmem [shape: f32[2,1,32], index: 10, kind: input, shape index: {}]
  %s11 = inlined_call_operand.vmem [shape: bf16[2,32,64], index: 11, kind: input, shape index: {}]
  %s12 = inlined_call_operand.vmem [shape: f32[2,1,64], index: 12, kind: input, shape index: {}]
  %s13 = inlined_call_operand.vmem [shape: bf16[2,64,32], index: 13, kind: input, shape index: {}]
  %s14 = inlined_call_operand.vmem [shape: f32[2,1,32], index: 14, kind: input, shape index: {}]
  %s15 = inlined_call_operand.vmem [shape: f32[2,1,32], index: 15, kind: input, shape index: {}]
  %s16 = inlined_call_operand.vmem [shape: f32[2,1,32], index: 16, kind: input, shape index: {}]
  %s17 = inlined_call_operand.hbm [shape: f32[2,32], index: 17, kind: output, shape index: {}]
  %s18 = sld [smem:[#allocation0]]
  $region78: #{transformer_encoder_forward.1} parent=0
    _
  %s20 = ssub.s32 1, %s18
  %s21 = scalar_select 0, %s20, %s18
  $region1: #{transformer_encoder_forward.1} parent=0
    #allocation2 [shape = 'u8[1024]{0}', space=vmem, size = 0x400, scoped, tag = 'output window, operand 0, single buffered']
    #allocation3 [shape = 's32[1]{0}', space=sflag, size = 0x4, scoped, tag = 'scoped memory for transformer_encoder_forward.1']
    %22 = vsyncpa [#allocation3], 0
    // Predicated region
    $region2: #{transformer_encoder_forward.1} parent=1 // pred_check
      _
    $region3: #{transformer_encoder_forward.1} parent=1 // pred_check_branch
      %24 = sbr.rel (0) target = $region5
    $region4: #{transformer_encoder_forward.1} parent=1 // pred_region
      _
    $region5: #{transformer_encoder_forward.1} parent=1 // pred_fallthru
      _
    // Predicated region
    $region6: #{transformer_encoder_forward.1} parent=1 // pred_check
      _
    $region7: #{transformer_encoder_forward.1} parent=1 // pred_check_branch
      %26 = sbr.rel (0) target = $region9
    $region8: #{transformer_encoder_forward.1} parent=1 // pred_region
      _
    $region9: #{transformer_encoder_forward.1} parent=1 // pred_fallthru
      _
    // Predicated region
    $region10: #{transformer_encoder_forward.1} parent=1 // pred_check
      _
    $region11: #{transformer_encoder_forward.1} parent=1 // pred_check_branch
      %28 = sbr.rel (0) target = $region13
    $region12: #{transformer_encoder_forward.1} parent=1 // pred_region
      _
    $region13: #{transformer_encoder_forward.1} parent=1 // pred_fallthru
      _
    // Predicated region
    $region14: #{transformer_encoder_forward.1} parent=1 // pred_check
      _
    $region15: #{transformer_encoder_forward.1} parent=1 // pred_check_branch
      %30 = sbr.rel (0) target = $region17
    $region16: #{transformer_encoder_forward.1} parent=1 // pred_region
      _
    $region17: #{transformer_encoder_forward.1} parent=1 // pred_fallthru
      _
    // Predicated region
    $region18: #{transformer_encoder_forward.1} parent=1 // pred_check
      _
    $region19: #{transformer_encoder_forward.1} parent=1 // pred_check_branch
      %32 = sbr.rel (0) target = $region21
    $region20: #{transformer_encoder_forward.1} parent=1 // pred_region
      _
    $region21: #{transformer_encoder_forward.1} parent=1 // pred_fallthru
      _
    // Predicated region
    $region22: #{transformer_encoder_forward.1} parent=1 // pred_check
      _
    $region23: #{transformer_encoder_forward.1} parent=1 // pred_check_branch
      %34 = sbr.rel (0) target = $region25
    $region24: #{transformer_encoder_forward.1} parent=1 // pred_region
      _
    $region25: #{transformer_encoder_forward.1} parent=1 // pred_fallthru
      _
    // Predicated region
    $region26: #{transformer_encoder_forward.1} parent=1 // pred_check
      _
    $region27: #{transformer_encoder_forward.1} parent=1 // pred_check_branch
      %36 = sbr.rel (0) target = $region29
    $region28: #{transformer_encoder_forward.1} parent=1 // pred_region
      _
    $region29: #{transformer_encoder_forward.1} parent=1 // pred_fallthru
      _
    // Predicated region
    $region30: #{transformer_encoder_forward.1} parent=1 // pred_check
      _
    $region31: #{transformer_encoder_forward.1} parent=1 // pred_check_branch
      %38 = sbr.rel (0) target = $region33
    $region32: #{transformer_encoder_forward.1} parent=1 // pred_region
      _
    $region33: #{transformer_encoder_forward.1} parent=1 // pred_fallthru
      _
    // Predicated region
    $region34: #{transformer_encoder_forward.1} parent=1 // pred_check
      _
    $region35: #{transformer_encoder_forward.1} parent=1 // pred_check_branch
      %40 = sbr.rel (0) target = $region37
    $region36: #{transformer_encoder_forward.1} parent=1 // pred_region
      _
    $region37: #{transformer_encoder_forward.1} parent=1 // pred_fallthru
      _
    // Predicated region
    $region38: #{transformer_encoder_forward.1} parent=1 // pred_check
      _
    $region39: #{transformer_encoder_forward.1} parent=1 // pred_check_branch
      %42 = sbr.rel (0) target = $region41
    $region40: #{transformer_encoder_forward.1} parent=1 // pred_region
      _
    $region41: #{transformer_encoder_forward.1} parent=1 // pred_fallthru
      _
    // Predicated region
    $region42: #{transformer_encoder_forward.1} parent=1 // pred_check
      _
    $region43: #{transformer_encoder_forward.1} parent=1 // pred_check_branch
      %44 = sbr.rel (0) target = $region45
    $region44: #{transformer_encoder_forward.1} parent=1 // pred_region
      _
    $region45: #{transformer_encoder_forward.1} parent=1 // pred_fallthru
      _
    // Predicated region
    $region46: #{transformer_encoder_forward.1} parent=1 // pred_check
      _
    $region47: #{transformer_encoder_forward.1} parent=1 // pred_check_branch
      %46 = sbr.rel (0) target = $region49
    $region48: #{transformer_encoder_forward.1} parent=1 // pred_region
      _
    $region49: #{transformer_encoder_forward.1} parent=1 // pred_fallthru
      _
    // Predicated region
    $region50: #{transformer_encoder_forward.1} parent=1 // pred_check
      _
    $region51: #{transformer_encoder_forward.1} parent=1 // pred_check_branch
      %48 = sbr.rel (0) target = $region53
    $region52: #{transformer_encoder_forward.1} parent=1 // pred_region
      _
    $region53: #{transformer_encoder_forward.1} parent=1 // pred_fallthru
      _
    // Predicated region
    $region54: #{transformer_encoder_forward.1} parent=1 // pred_check
      _
    $region55: #{transformer_encoder_forward.1} parent=1 // pred_check_branch
      %50 = sbr.rel (0) target = $region57
    $region56: #{transformer_encoder_forward.1} parent=1 // pred_region
      _
    $region57: #{transformer_encoder_forward.1} parent=1 // pred_fallthru
      _
    // Predicated region
    $region58: #{transformer_encoder_forward.1} parent=1 // pred_check
      _
    $region59: #{transformer_encoder_forward.1} parent=1 // pred_check_branch
      %52 = sbr.rel (0) target = $region61
    $region60: #{transformer_encoder_forward.1} parent=1 // pred_region
      _
    $region61: #{transformer_encoder_forward.1} parent=1 // pred_fallthru
      _
    // Predicated region
    $region62: #{transformer_encoder_forward.1} parent=1 // pred_check
      _
    $region63: #{transformer_encoder_forward.1} parent=1 // pred_check_branch
      %54 = sbr.rel (0) target = $region65
    $region64: #{transformer_encoder_forward.1} parent=1 // pred_region
      _
    $region65: #{transformer_encoder_forward.1} parent=1 // pred_fallthru
      _
    // Predicated region
    $region66: #{transformer_encoder_forward.1} parent=1 // pred_check
      _
    $region67: #{transformer_encoder_forward.1} parent=1 // pred_check_branch
      %56 = sbr.rel (0) target = $region69
    $region68: #{transformer_encoder_forward.1} parent=1 // pred_region
      _
    $region69: #{transformer_encoder_forward.1} parent=1 // pred_fallthru
      _
    %v58 = vld [vmem:[%s1] sm:$0xff]
    %v59 = vld [vmem:[%s1 + $0x8] sm:$0xff]
    %v60 = vld [vmem:[%s1 + $0x10] sm:$0xff]
    %v61 = vld [vmem:[%s1 + $0x18] sm:$0xff]
    %v62 = vld [vmem:[%s1 + $0x20] sm:$0xff]
    %v63 = vld [vmem:[%s1 + $0x28] sm:$0xff]
    %v64 = vld [vmem:[%s1 + $0x30] sm:$0xff]
    %v65 = vld [vmem:[%s1 + $0x38] sm:$0xff]
    %v66 = vld [vmem:[%s0] sm:$0xff]
    %v67 = vld [vmem:[%s0 + $0x8] sm:$0xff]
    %v68 = vld [vmem:[%s3] sm:$0x1]
    %v69 = vld [vmem:[%s4] sm:$0x1]
    %vm70 = vcmask 261120
    %v71 = vsel %vm70, %v66, 0.0
    %72 = vadd.xlane.f32.xlu0 %v71
    %v73 = vpop.xlane.xlu0 %72
    %v74 = vsel %vm70, %v67, 0.0
    %75 = vadd.xlane.f32.xlu0 %v74
    %v76 = vpop.xlane.xlu0 %75
    %v77 = vrcp.pop 32.0
    %v78 = vmul.f32 32.0, %v77
    %v79 = vsub.f32 1.0, %v78
    %v80 = vmul.f32 %v77, %v79
    %v81 = vadd.f32 %v77, %v80
    %vm82 = vweird.f32 %v77
    %v83 = vsel %vm82, %v77, %v81
    %v84 = vmul.f32 %v73, %v83
    %v85 = vmul.f32 %v76, %v83
    %v86 = vsub.f32 %v66, %v84
    %v87 = vsub.f32 %v67, %v85
    %v88 = vmul.f32 %v86, %v86
    %v89 = vmul.f32 %v87, %v87
    %v90 = vsel %vm70, %v88, 0.0
    %91 = vadd.xlane.f32.xlu0 %v90
    %v92 = vpop.xlane.xlu0 %91
    %v93 = vsel %vm70, %v89, 0.0
    %94 = vadd.xlane.f32.xlu0 %v93
    %v95 = vpop.xlane.xlu0 %94
    %v96 = vmul.f32 %v92, %v83
    %v97 = vmul.f32 %v95, %v83
    %v98 = vadd.f32 %v96, 1e-12
    %v99 = vadd.f32 %v97, 1e-12
    %v100 = vrsqrt.pop %v98
    %v101 = vmul.f32 %v100, %v98
    %v102 = vmul.f32 %v101, %v100
    %v103 = vmul.f32 0.5, %v102
    %v104 = vsub.f32 1.5, %v103
    %v105 = vmul.f32 %v100, %v104
    %vm106 = vweird.f32 %v98
    %vm107 = vweird.f32 %v100
    %vm108 = vmor %vm106, %vm107
    %v109 = vsel %vm108, %v100, %v105
    %v110 = vrsqrt.pop %v99
    %v111 = vmul.f32 %v110, %v99
    %v112 = vmul.f32 %v111, %v110
    %v113 = vmul.f32 0.5, %v112
    %v114 = vsub.f32 1.5, %v113
    %v115 = vmul.f32 %v110, %v114
    %vm116 = vweird.f32 %v99
    %vm117 = vweird.f32 %v110
    %vm118 = vmor %vm116, %vm117
    %v119 = vsel %vm118, %v110, %v115
    %v120 = vmul.f32 %v86, %v109
    %v121 = vmul.f32 %v87, %v119
    %v123 = vperm.slane %v68, 0
    %v125 = vmul.f32 %v120, %v123
    %v126 = vmul.f32 %v121, %v123
    %v128 = vperm.slane %v69, 0
    %v130 = vadd.f32 %v125, %v128
    %v131 = vadd.f32 %v126, %v128
    %v132 = vpack.c.bf16 %v131, %v130
    %v133 = vld [vmem:[%s5] sm:$0xf]
    %v134 = vld [vmem:[%s5 + $0x4] sm:$0xf]
    %v135 = vld [vmem:[%s5 + $0x8] sm:$0xf]
    %v136 = vld [vmem:[%s5 + $0xc] sm:$0xf]
    %v137 = vld [vmem:[%s6] sm:$0x1]
    %v139 = vperm.slane %v137, 0
    %v145 = vunpack.c.l.b16 %v133
    %v146 = vunpack.c.l.b16 %v134
    %v147 = vunpack.c.l.b16 %v135
    %v148 = vunpack.c.l.b16 %v136
    %v149 = vpack.c.b16 %v146, %v145
    %v150 = vpack.c.b16 %v148, %v147
    %v154 = vsel %vm70, %v132, 0
    %156 = vmatpush.bf16.msra.mxu0 0
    %157 = vmatpush.bf16.msra.mxu0 0
    %158 = vmatpush.bf16.msra.mxu0 0
    %159 = vmatpush.bf16.msra.mxu0 0
    %160 = vmatpush.bf16.msra.mxu0 0
    %161 = vmatpush.bf16.msra.mxu0 0
    %162 = vmatpush.bf16.msra.mxu0 %v150
    %163 = vmatpush.bf16.msra.mxu0 %v149
    %164 = vmatmul.bf16.gmra.mxu0 %v154
    %v165 = vpop.f32.mrf.mxu0
    %v166 = vadd.f32 %v139, %v165
    %v167 = vpop.f32.mrf.mxu0
    %v168 = vadd.f32 %v139, %v167
    %169 = vdwg.mxu0
    %171 = vrot.lane.b32.xlu0 %v166, 120
    %v172 = vpop.permute.xlu0 %171
    %174 = vrot.lane.b32.xlu0 %v166, 112
    %v175 = vpop.permute.xlu0 %174
    %177 = vrot.lane.b32.xlu0 %v166, 104
    %v178 = vpop.permute.xlu0 %177
    %181 = vrot.lane.b32.xlu0 %v168, 120
    %v182 = vpop.permute.xlu0 %181
    %184 = vrot.lane.b32.xlu0 %v168, 112
    %v185 = vpop.permute.xlu0 %184
    %187 = vrot.lane.b32.xlu0 %v168, 104
    %v188 = vpop.permute.xlu0 %187
    %v190 = vpack.c.bf16 %v172, %v166
    %v191 = vpack.c.bf16 %v178, %v175
    %v192 = vpack.c.bf16 %v182, %v168
    %v193 = vpack.c.bf16 %v188, %v185
    %198 = vrot.lane.b32.xlu0 %v190, 96
    %v199 = vpop.permute.xlu0 %198
    %200 = vrot.lane.b32.xlu0 %v191, 96
    %v201 = vpop.permute.xlu0 %200
    %202 = vrot.lane.b32.xlu0 %v192, 96
    %v203 = vpop.permute.xlu0 %202
    %204 = vrot.lane.b32.xlu0 %v193, 96
    %v205 = vpop.permute.xlu0 %204
    %vm206 = vcmask 64512
    %v208 = vsel %vm206, %v190, 0
    %v211 = vsel %vm206, %v191, 0
    %v214 = vsel %vm206, %v192, 0
    %v217 = vsel %vm206, %v193, 0
    %v220 = vsel %vm206, %v199, 0
    %v223 = vsel %vm206, %v201, 0
    %v226 = vsel %vm206, %v203, 0
    %v229 = vsel %vm206, %v205, 0
    %231 = vmatpush.bf16.xpose.msra.mxu0 0
    %232 = vmatpush.bf16.xpose.msra.mxu0 0
    %233 = vmatpush.bf16.xpose.msra.mxu0 0
    %234 = vmatpush.bf16.xpose.msra.mxu0 0
    %235 = vmatpush.bf16.xpose.msra.mxu0 %v229
    %236 = vmatpush.bf16.xpose.msra.mxu0 %v226
    %237 = vmatpush.bf16.xpose.msra.mxu0 %v223
    %238 = vmatpush.bf16.xpose.msra.mxu0 %v220
    %239 = vmatmul.bf16.gmra.mxu0 %v208
    %v240 = vpop.f32.mrf.mxu0
    %v241 = vadd.f32 %v58, %v240
    %v242 = vpop.f32.mrf.mxu0
    %v243 = vadd.f32 %v59, %v242
    %244 = vmatmul.bf16.gmra.mxu0 %v211
    %v245 = vpop.f32.mrf.mxu0
    %v246 = vadd.f32 %v60, %v245
    %v247 = vpop.f32.mrf.mxu0
    %v248 = vadd.f32 %v61, %v247
    %249 = vmatmul.bf16.gmra.mxu0 %v214
    %v250 = vpop.f32.mrf.mxu0
    %v251 = vadd.f32 %v62, %v250
    %v252 = vpop.f32.mrf.mxu0
    %v253 = vadd.f32 %v63, %v252
    %254 = vmatmul.bf16.gmra.mxu0 %v217
    %v255 = vpop.f32.mrf.mxu0
    %v256 = vadd.f32 %v64, %v255
    %v257 = vpop.f32.mrf.mxu0
    %v258 = vadd.f32 %v65, %v257
    %259 = vdwg.mxu0
    %vm260 = vcmask 523264
    %v261 = vsel %vm260, %v241, -inf
    %262 = vmax.xlane.f32.xlu0 %v261
    %v263 = vpop.xlane.xlu0 %262
    %v264 = vsel %vm260, %v243, -inf
    %265 = vmax.xlane.f32.xlu0 %v264
    %v266 = vpop.xlane.xlu0 %265
    %v267 = vsel %vm260, %v246, -inf
    %268 = vmax.xlane.f32.xlu0 %v267
    %v269 = vpop.xlane.xlu0 %268
    %v270 = vsel %vm260, %v248, -inf
    %271 = vmax.xlane.f32.xlu0 %v270
    %v272 = vpop.xlane.xlu0 %271
    %v273 = vsel %vm260, %v251, -inf
    %274 = vmax.xlane.f32.xlu0 %v273
    %v275 = vpop.xlane.xlu0 %274
    %v276 = vsel %vm260, %v253, -inf
    %277 = vmax.xlane.f32.xlu0 %v276
    %v278 = vpop.xlane.xlu0 %277
    %v279 = vsel %vm260, %v256, -inf
    %280 = vmax.xlane.f32.xlu0 %v279
    %v281 = vpop.xlane.xlu0 %280
    %v282 = vsel %vm260, %v258, -inf
    %283 = vmax.xlane.f32.xlu0 %v282
    %v284 = vpop.xlane.xlu0 %283
    %v285 = vsub.f32 %v241, %v263
    %v286 = vsub.f32 %v243, %v266
    %v287 = vsub.f32 %v246, %v269
    %v288 = vsub.f32 %v248, %v272
    %v289 = vsub.f32 %v251, %v275
    %v290 = vsub.f32 %v253, %v278
    %v291 = vsub.f32 %v256, %v281
    %v292 = vsub.f32 %v258, %v284
    %v293 = vmul.f32 %v285, 1.442695
    %v294 = vpow.pop %v293
    %v295 = vmul.f32 %v286, 1.442695
    %v296 = vpow.pop %v295
    %v297 = vmul.f32 %v287, 1.442695
    %v298 = vpow.pop %v297
    %v299 = vmul.f32 %v288, 1.442695
    %v300 = vpow.pop %v299
    %v301 = vmul.f32 %v289, 1.442695
    %v302 = vpow.pop %v301
    %v303 = vmul.f32 %v290, 1.442695
    %v304 = vpow.pop %v303
    %v305 = vmul.f32 %v291, 1.442695
    %v306 = vpow.pop %v305
    %v307 = vmul.f32 %v292, 1.442695
    %v308 = vpow.pop %v307
    %v309 = vsel %vm260, %v294, 0.0
    %310 = vadd.xlane.f32.xlu0 %v309
    %v311 = vpop.xlane.xlu0 %310
    %v312 = vsel %vm260, %v296, 0.0
    %313 = vadd.xlane.f32.xlu0 %v312
    %v314 = vpop.xlane.xlu0 %313
    %v315 = vsel %vm260, %v298, 0.0
    %316 = vadd.xlane.f32.xlu0 %v315
    %v317 = vpop.xlane.xlu0 %316
    %v318 = vsel %vm260, %v300, 0.0
    %319 = vadd.xlane.f32.xlu0 %v318
    %v320 = vpop.xlane.xlu0 %319
    %v321 = vsel %vm260, %v302, 0.0
    %322 = vadd.xlane.f32.xlu0 %v321
    %v323 = vpop.xlane.xlu0 %322
    %v324 = vsel %vm260, %v304, 0.0
    %325 = vadd.xlane.f32.xlu0 %v324
    %v326 = vpop.xlane.xlu0 %325
    %v327 = vsel %vm260, %v306, 0.0
    %328 = vadd.xlane.f32.xlu0 %v327
    %v329 = vpop.xlane.xlu0 %328
    %v330 = vsel %vm260, %v308, 0.0
    %331 = vadd.xlane.f32.xlu0 %v330
    %v332 = vpop.xlane.xlu0 %331
    %v333 = vrcp.pop %v311
    %v334 = vmul.f32 %v311, %v333
    %v335 = vsub.f32 1.0, %v334
    %v336 = vmul.f32 %v333, %v335
    %v337 = vadd.f32 %v333, %v336
    %vm338 = vweird.f32 %v311
    %vm339 = vweird.f32 %v333
    %vm340 = vmor %vm338, %vm339
    %v341 = vsel %vm340, %v333, %v337
    %v342 = vand.u32 2147483647, %v311
    %vm343 = vcmp.eq.f32.partialorder %v342, 8.507059e+37
    %v344 = vand.u32 %v311, 2147483648
    %v345 = vor.u32 1.1754944e-38, %v344
    %v346 = vsel %vm343, %v345, %v341
    %v347 = vmul.f32 %v294, %v346
    %v348 = vrcp.pop %v314
    %v349 = vmul.f32 %v314, %v348
    %v350 = vsub.f32 1.0, %v349
    %v351 = vmul.f32 %v348, %v350
    %v352 = vadd.f32 %v348, %v351
    %vm353 = vweird.f32 %v314
    %vm354 = vweird.f32 %v348
    %vm355 = vmor %vm353, %vm354
    %v356 = vsel %vm355, %v348, %v352
    %v357 = vand.u32 2147483647, %v314
    %vm358 = vcmp.eq.f32.partialorder %v357, 8.507059e+37
    %v359 = vand.u32 %v314, 2147483648
    %v360 = vor.u32 1.1754944e-38, %v359
    %v361 = vsel %vm358, %v360, %v356
    %v362 = vmul.f32 %v296, %v361
    %v363 = vrcp.pop %v317
    %v364 = vmul.f32 %v317, %v363
    %v365 = vsub.f32 1.0, %v364
    %v366 = vmul.f32 %v363, %v365
    %v367 = vadd.f32 %v363, %v366
    %vm368 = vweird.f32 %v317
    %vm369 = vweird.f32 %v363
    %vm370 = vmor %vm368, %vm369
    %v371 = vsel %vm370, %v363, %v367
    %v372 = vand.u32 2147483647, %v317
    %vm373 = vcmp.eq.f32.partialorder %v372, 8.507059e+37
    %v374 = vand.u32 %v317, 2147483648
    %v375 = vor.u32 1.1754944e-38, %v374
    %v376 = vsel %vm373, %v375, %v371
    %v377 = vmul.f32 %v298, %v376
    %v378 = vrcp.pop %v320
    %v379 = vmul.f32 %v320, %v378
    %v380 = vsub.f32 1.0, %v379
    %v381 = vmul.f32 %v378, %v380
    %v382 = vadd.f32 %v378, %v381
    %vm383 = vweird.f32 %v320
    %vm384 = vweird.f32 %v378
    %vm385 = vmor %vm383, %vm384
    %v386 = vsel %vm385, %v378, %v382
    %v387 = vand.u32 2147483647, %v320
    %vm388 = vcmp.eq.f32.partialorder %v387, 8.507059e+37
    %v389 = vand.u32 %v320, 2147483648
    %v390 = vor.u32 1.1754944e-38, %v389
    %v391 = vsel %vm388, %v390, %v386
    %v392 = vmul.f32 %v300, %v391
    %v393 = vrcp.pop %v323
    %v394 = vmul.f32 %v323, %v393
    %v395 = vsub.f32 1.0, %v394
    %v396 = vmul.f32 %v393, %v395
    %v397 = vadd.f32 %v393, %v396
    %vm398 = vweird.f32 %v323
    %vm399 = vweird.f32 %v393
    %vm400 = vmor %vm398, %vm399
    %v401 = vsel %vm400, %v393, %v397
    %v402 = vand.u32 2147483647, %v323
    %vm403 = vcmp.eq.f32.partialorder %v402, 8.507059e+37
    %v404 = vand.u32 %v323, 2147483648
    %v405 = vor.u32 1.1754944e-38, %v404
    %v406 = vsel %vm403, %v405, %v401
    %v407 = vmul.f32 %v302, %v406
    %v408 = vrcp.pop %v326
    %v409 = vmul.f32 %v326, %v408
    %v410 = vsub.f32 1.0, %v409
    %v411 = vmul.f32 %v408, %v410
    %v412 = vadd.f32 %v408, %v411
    %vm413 = vweird.f32 %v326
    %vm414 = vweird.f32 %v408
    %vm415 = vmor %vm413, %vm414
    %v416 = vsel %vm415, %v408, %v412
    %v417 = vand.u32 2147483647, %v326
    %vm418 = vcmp.eq.f32.partialorder %v417, 8.507059e+37
    %v419 = vand.u32 %v326, 2147483648
    %v420 = vor.u32 1.1754944e-38, %v419
    %v421 = vsel %vm418, %v420, %v416
    %v422 = vmul.f32 %v304, %v421
    %v423 = vrcp.pop %v329
    %v424 = vmul.f32 %v329, %v423
    %v425 = vsub.f32 1.0, %v424
    %v426 = vmul.f32 %v423, %v425
    %v427 = vadd.f32 %v423, %v426
    %vm428 = vweird.f32 %v329
    %vm429 = vweird.f32 %v423
    %vm430 = vmor %vm428, %vm429
    %v431 = vsel %vm430, %v423, %v427
    %v432 = vand.u32 2147483647, %v329
    %vm433 = vcmp.eq.f32.partialorder %v432, 8.507059e+37
    %v434 = vand.u32 %v329, 2147483648
    %v435 = vor.u32 1.1754944e-38, %v434
    %v436 = vsel %vm433, %v435, %v431
    %v437 = vmul.f32 %v306, %v436
    %v438 = vrcp.pop %v332
    %v439 = vmul.f32 %v332, %v438
    %v440 = vsub.f32 1.0, %v439
    %v441 = vmul.f32 %v438, %v440
    %v442 = vadd.f32 %v438, %v441
    %vm443 = vweird.f32 %v332
    %vm444 = vweird.f32 %v438
    %vm445 = vmor %vm443, %vm444
    %v446 = vsel %vm445, %v438, %v442
    %v447 = vand.u32 2147483647, %v332
    %vm448 = vcmp.eq.f32.partialorder %v447, 8.507059e+37
    %v449 = vand.u32 %v332, 2147483648
    %v450 = vor.u32 1.1754944e-38, %v449
    %v451 = vsel %vm448, %v450, %v446
    %v452 = vmul.f32 %v308, %v451
    %v453 = vpack.c.bf16 %v362, %v347
    %v454 = vpack.c.bf16 %v392, %v377
    %v455 = vpack.c.bf16 %v422, %v407
    %v456 = vpack.c.bf16 %v452, %v437
    %457 = vrot.lane.b32.xlu0 %v190, 64
    %v458 = vpop.permute.xlu0 %457
    %459 = vrot.lane.b32.xlu0 %v191, 64
    %v460 = vpop.permute.xlu0 %459
    %461 = vrot.lane.b32.xlu0 %v192, 64
    %v462 = vpop.permute.xlu0 %461
    %463 = vrot.lane.b32.xlu0 %v193, 64
    %v464 = vpop.permute.xlu0 %463
    %v470 = vsel %vm260, %v453, 0
    %v473 = vsel %vm260, %v454, 0
    %v476 = vsel %vm260, %v455, 0
    %v479 = vsel %vm260, %v456, 0
    %481 = vmatpush.bf16.msra.mxu0 0
    %482 = vmatpush.bf16.msra.mxu0 0
    %483 = vmatpush.bf16.msra.mxu0 0
    %484 = vmatpush.bf16.msra.mxu0 0
    %485 = vmatpush.bf16.msra.mxu0 %v464
    %486 = vmatpush.bf16.msra.mxu0 %v462
    %487 = vmatpush.bf16.msra.mxu0 %v460
    %488 = vmatpush.bf16.msra.mxu0 %v458
    %489 = vmatmul.bf16.gmra.mxu0 %v470
    %v490 = vpop.f32.mrf.mxu0
    %v491 = vadd.f32 0.0, %v490
    %v492 = vpop.f32.mrf.mxu0
    %v493 = vadd.f32 0.0, %v492
    %494 = vmatmul.bf16.gmra.mxu0 %v473
    %v495 = vpop.f32.mrf.mxu0
    %v496 = vadd.f32 0.0, %v495
    %v497 = vpop.f32.mrf.mxu0
    %v498 = vadd.f32 0.0, %v497
    %499 = vmatmul.bf16.gmra.mxu0 %v476
    %v500 = vpop.f32.mrf.mxu0
    %v501 = vadd.f32 0.0, %v500
    %v502 = vpop.f32.mrf.mxu0
    %v503 = vadd.f32 0.0, %v502
    %504 = vmatmul.bf16.gmra.mxu0 %v479
    %v505 = vpop.f32.mrf.mxu0
    %v506 = vadd.f32 0.0, %v505
    %v507 = vpop.f32.mrf.mxu0
    %v508 = vadd.f32 0.0, %v507
    %509 = vdwg.mxu0
    %v510 = vld [vmem:[%s8] sm:$0x1]
    %v511 = vpack.c.bf16 %v501, %v491
    %v512 = vld [vmem:[%s7] sm:$0xf]
    %v514 = vsel %vm206, %v511, 0
    %vm516 = vcmask 1043456
    %v518 = vsel %vm516, %v512, 0
    %520 = vmatpush.bf16.msra.mxu0 0
    %521 = vmatpush.bf16.msra.mxu0 0
    %522 = vmatpush.bf16.msra.mxu0 0
    %523 = vmatpush.bf16.msra.mxu0 0
    %524 = vmatpush.bf16.msra.mxu0 0
    %525 = vmatpush.bf16.msra.mxu0 0
    %526 = vmatpush.bf16.msra.mxu0 0
    %527 = vmatpush.bf16.msra.mxu0 %v518
    %528 = vmatmul.bf16.gmra.mxu0 %v514
    %v529 = vpop.f32.mrf.mxu0
    %v530 = vadd.f32 0.0, %v529
    %v531 = vpop.f32.mrf.mxu0
    %v532 = vadd.f32 0.0, %v531
    %533 = vdwg.mxu0
    %v535 = vperm.slane %v510, 0
    %v537 = vadd.f32 %v535, %v530
    %v538 = vadd.f32 %v535, %v532
    %v539 = vpack.c.bf16 %v503, %v493
    %s540 = scalar_lea.vmem %s7, 4
    %v541 = vld [vmem:[%s540] sm:$0xf]
    %v543 = vsel %vm206, %v539, 0
    %v546 = vsel %vm516, %v541, 0
    %548 = vmatpush.bf16.msra.mxu0 0
    %549 = vmatpush.bf16.msra.mxu0 0
    %550 = vmatpush.bf16.msra.mxu0 0
    %551 = vmatpush.bf16.msra.mxu0 0
    %552 = vmatpush.bf16.msra.mxu0 0
    %553 = vmatpush.bf16.msra.mxu0 0
    %554 = vmatpush.bf16.msra.mxu0 0
    %555 = vmatpush.bf16.msra.mxu0 %v546
    %556 = vmatmul.bf16.gmra.mxu0 %v543
    %v557 = vpop.f32.mrf.mxu0
    %v558 = vadd.f32 0.0, %v557
    %v559 = vpop.f32.mrf.mxu0
    %v560 = vadd.f32 0.0, %v559
    %561 = vdwg.mxu0
    %v562 = vadd.f32 %v537, %v558
    %v563 = vadd.f32 %v538, %v560
    %v564 = vpack.c.bf16 %v506, %v496
    %s565 = scalar_lea.vmem %s7, 8
    %v566 = vld [vmem:[%s565] sm:$0xf]
    %v568 = vsel %vm206, %v564, 0
    %v571 = vsel %vm516, %v566, 0
    %573 = vmatpush.bf16.msra.mxu0 0
    %574 = vmatpush.bf16.msra.mxu0 0
    %575 = vmatpush.bf16.msra.mxu0 0
    %576 = vmatpush.bf16.msra.mxu0 0
    %577 = vmatpush.bf16.msra.mxu0 0
    %578 = vmatpush.bf16.msra.mxu0 0
    %579 = vmatpush.bf16.msra.mxu0 0
    %580 = vmatpush.bf16.msra.mxu0 %v571
    %581 = vmatmul.bf16.gmra.mxu0 %v568
    %v582 = vpop.f32.mrf.mxu0
    %v583 = vadd.f32 0.0, %v582
    %v584 = vpop.f32.mrf.mxu0
    %v585 = vadd.f32 0.0, %v584
    %586 = vdwg.mxu0
    %v587 = vadd.f32 %v562, %v583
    %v588 = vadd.f32 %v563, %v585
    %v589 = vpack.c.bf16 %v508, %v498
    %s590 = scalar_lea.vmem %s7, 12
    %v591 = vld [vmem:[%s590] sm:$0xf]
    %v593 = vsel %vm206, %v589, 0
    %v596 = vsel %vm516, %v591, 0
    %598 = vmatpush.bf16.msra.mxu0 0
    %599 = vmatpush.bf16.msra.mxu0 0
    %600 = vmatpush.bf16.msra.mxu0 0
    %601 = vmatpush.bf16.msra.mxu0 0
    %602 = vmatpush.bf16.msra.mxu0 0
    %603 = vmatpush.bf16.msra.mxu0 0
    %604 = vmatpush.bf16.msra.mxu0 0
    %605 = vmatpush.bf16.msra.mxu0 %v596
    %606 = vmatmul.bf16.gmra.mxu0 %v593
    %v607 = vpop.f32.mrf.mxu0
    %v608 = vadd.f32 0.0, %v607
    %v609 = vpop.f32.mrf.mxu0
    %v610 = vadd.f32 0.0, %v609
    %611 = vdwg.mxu0
    %v612 = vadd.f32 %v587, %v608
    %v613 = vadd.f32 %v588, %v610
    %v614 = vadd.f32 %v612, %v130
    %v615 = vadd.f32 %v613, %v131
    %v616 = vld [vmem:[%s9] sm:$0x1]
    %v617 = vld [vmem:[%s10] sm:$0x1]
    %v618 = vsel %vm70, %v614, 0.0
    %619 = vadd.xlane.f32.xlu0 %v618
    %v620 = vpop.xlane.xlu0 %619
    %v621 = vsel %vm70, %v615, 0.0
    %622 = vadd.xlane.f32.xlu0 %v621
    %v623 = vpop.xlane.xlu0 %622
    %v624 = vmul.f32 %v620, %v83
    %v625 = vmul.f32 %v623, %v83
    %v626 = vsub.f32 %v614, %v624
    %v627 = vsub.f32 %v615, %v625
    %v628 = vmul.f32 %v626, %v626
    %v629 = vmul.f32 %v627, %v627
    %v630 = vsel %vm70, %v628, 0.0
    %631 = vadd.xlane.f32.xlu0 %v630
    %v632 = vpop.xlane.xlu0 %631
    %v633 = vsel %vm70, %v629, 0.0
    %634 = vadd.xlane.f32.xlu0 %v633
    %v635 = vpop.xlane.xlu0 %634
    %v636 = vmul.f32 %v632, %v83
    %v637 = vmul.f32 %v635, %v83
    %v638 = vadd.f32 %v636, 1e-12
    %v639 = vadd.f32 %v637, 1e-12
    %v640 = vrsqrt.pop %v638
    %v641 = vmul.f32 %v640, %v638
    %v642 = vmul.f32 %v641, %v640
    %v643 = vmul.f32 0.5, %v642
    %v644 = vsub.f32 1.5, %v643
    %v645 = vmul.f32 %v640, %v644
    %vm646 = vweird.f32 %v638
    %vm647 = vweird.f32 %v640
    %vm648 = vmor %vm646, %vm647
    %v649 = vsel %vm648, %v640, %v645
    %v650 = vrsqrt.pop %v639
    %v651 = vmul.f32 %v650, %v639
    %v652 = vmul.f32 %v651, %v650
    %v653 = vmul.f32 0.5, %v652
    %v654 = vsub.f32 1.5, %v653
    %v655 = vmul.f32 %v650, %v654
    %vm656 = vweird.f32 %v639
    %vm657 = vweird.f32 %v650
    %vm658 = vmor %vm656, %vm657
    %v659 = vsel %vm658, %v650, %v655
    %v660 = vmul.f32 %v626, %v649
    %v661 = vmul.f32 %v627, %v659
    %v663 = vperm.slane %v616, 0
    %v665 = vmul.f32 %v660, %v663
    %v666 = vmul.f32 %v661, %v663
    %v668 = vperm.slane %v617, 0
    %v670 = vadd.f32 %v665, %v668
    %v671 = vadd.f32 %v666, %v668
    %v672 = vpack.c.bf16 %v671, %v670
    %v673 = vld [vmem:[%s11] sm:$0xf]
    %v674 = vld [vmem:[%s11 + $0x4] sm:$0xf]
    %v675 = vld [vmem:[%s11 + $0x8] sm:$0xf]
    %v676 = vld [vmem:[%s11 + $0xc] sm:$0xf]
    %v677 = vld [vmem:[%s12] sm:$0x1]
    %v679 = vperm.slane %v677, 0
    %v685 = vunpack.c.l.b16 %v673
    %v686 = vunpack.c.l.b16 %v674
    %v687 = vunpack.c.l.b16 %v675
    %v688 = vunpack.c.l.b16 %v676
    %v689 = vpack.c.b16 %v686, %v685
    %v690 = vpack.c.b16 %v688, %v687
    %v694 = vsel %vm70, %v672, 0
    %696 = vmatpush.bf16.msra.mxu0 0
    %697 = vmatpush.bf16.msra.mxu0 0
    %698 = vmatpush.bf16.msra.mxu0 0
    %699 = vmatpush.bf16.msra.mxu0 0
    %700 = vmatpush.bf16.msra.mxu0 0
    %701 = vmatpush.bf16.msra.mxu0 0
    %702 = vmatpush.bf16.msra.mxu0 %v690
    %703 = vmatpush.bf16.msra.mxu0 %v689
    %704 = vmatmul.bf16.gmra.mxu0 %v694
    %v705 = vpop.f32.mrf.mxu0
    %v706 = vadd.f32 %v679, %v705
    %v707 = vpop.f32.mrf.mxu0
    %v708 = vadd.f32 %v679, %v707
    %709 = vdwg.mxu0
    %v710 = vmul.f32 %v706, %v706
    %v711 = vmul.f32 %v708, %v708
    %v712 = vmul.f32 %v706, %v710
    %v713 = vmul.f32 %v708, %v711
    %v714 = vmul.f32 %v712, 0.044715
    %v715 = vmul.f32 %v713, 0.044715
    %v716 = vadd.f32 %v706, %v714
    %v717 = vadd.f32 %v708, %v715
    %v718 = vmul.f32 %v716, 0.7978846
    %v719 = vmul.f32 %v717, 0.7978846
    %v720 = vtanh.pop %v718
    %v721 = vtanh.pop %v719
    %v722 = vadd.f32 %v720, 1.0
    %v723 = vadd.f32 %v721, 1.0
    %v724 = vmul.f32 %v722, 0.5
    %v725 = vmul.f32 %v723, 0.5
    %v726 = vmul.f32 %v706, %v724
    %v727 = vmul.f32 %v708, %v725
    %v728 = vpack.c.bf16 %v727, %v726
    %v729 = vld [vmem:[%s13] sm:$0xf]
    %v730 = vld [vmem:[%s13 + $0x4] sm:$0xf]
    %v731 = vld [vmem:[%s13 + $0x8] sm:$0xf]
    %v732 = vld [vmem:[%s13 + $0xc] sm:$0xf]
    %v733 = vld [vmem:[%s13 + $0x10] sm:$0xf]
    %v734 = vld [vmem:[%s13 + $0x14] sm:$0xf]
    %v735 = vld [vmem:[%s13 + $0x18] sm:$0xf]
    %v736 = vld [vmem:[%s13 + $0x1c] sm:$0xf]
    %v737 = vld [vmem:[%s14] sm:$0x1]
    %v739 = vperm.slane %v737, 0
    %v749 = vunpack.c.l.b16 %v729
    %v750 = vunpack.c.l.b16 %v730
    %v751 = vunpack.c.l.b16 %v731
    %v752 = vunpack.c.l.b16 %v732
    %v753 = vunpack.c.l.b16 %v733
    %v754 = vunpack.c.l.b16 %v734
    %v755 = vunpack.c.l.b16 %v735
    %v756 = vunpack.c.l.b16 %v736
    %v757 = vpack.c.b16 %v750, %v749
    %v758 = vpack.c.b16 %v752, %v751
    %v759 = vpack.c.b16 %v754, %v753
    %v760 = vpack.c.b16 %v756, %v755
    %v766 = vsel %vm260, %v728, 0
    %768 = vmatpush.bf16.msra.mxu0 0
    %769 = vmatpush.bf16.msra.mxu0 0
    %770 = vmatpush.bf16.msra.mxu0 0
    %771 = vmatpush.bf16.msra.mxu0 0
    %772 = vmatpush.bf16.msra.mxu0 %v760
    %773 = vmatpush.bf16.msra.mxu0 %v759
    %774 = vmatpush.bf16.msra.mxu0 %v758
    %775 = vmatpush.bf16.msra.mxu0 %v757
    %776 = vmatmul.bf16.gmra.mxu0 %v766
    %v777 = vpop.f32.mrf.mxu0
    %v778 = vadd.f32 %v739, %v777
    %v779 = vpop.f32.mrf.mxu0
    %v780 = vadd.f32 %v739, %v779
    %781 = vdwg.mxu0
    %v782 = vadd.f32 %v778, %v670
    %v783 = vadd.f32 %v780, %v671
    %v784 = vld [vmem:[%s15] sm:$0x1]
    %v785 = vld [vmem:[%s16] sm:$0x1]
    %v786 = vsel %vm70, %v782, 0.0
    %787 = vadd.xlane.f32.xlu0 %v786
    %v788 = vpop.xlane.xlu0 %787
    %v789 = vsel %vm70, %v783, 0.0
    %790 = vadd.xlane.f32.xlu0 %v789
    %v791 = vpop.xlane.xlu0 %790
    %v792 = vmul.f32 %v788, %v83
    %v793 = vmul.f32 %v791, %v83
    %v794 = vsub.f32 %v782, %v792
    %v795 = vsub.f32 %v783, %v793
    %v796 = vmul.f32 %v794, %v794
    %v797 = vmul.f32 %v795, %v795
    %v798 = vsel %vm70, %v796, 0.0
    %799 = vadd.xlane.f32.xlu0 %v798
    %v800 = vpop.xlane.xlu0 %799
    %v801 = vsel %vm70, %v797, 0.0
    %802 = vadd.xlane.f32.xlu0 %v801
    %v803 = vpop.xlane.xlu0 %802
    %v804 = vmul.f32 %v800, %v83
    %v805 = vmul.f32 %v803, %v83
    %v806 = vadd.f32 %v804, 1e-12
    %v807 = vadd.f32 %v805, 1e-12
    %v808 = vrsqrt.pop %v806
    %v809 = vmul.f32 %v808, %v806
    %v810 = vmul.f32 %v809, %v808
    %v811 = vmul.f32 0.5, %v810
    %v812 = vsub.f32 1.5, %v811
    %v813 = vmul.f32 %v808, %v812
    %vm814 = vweird.f32 %v806
    %vm815 = vweird.f32 %v808
    %vm816 = vmor %vm814, %vm815
    %v817 = vsel %vm816, %v808, %v813
    %v818 = vrsqrt.pop %v807
    %v819 = vmul.f32 %v818, %v807
    %v820 = vmul.f32 %v819, %v818
    %v821 = vmul.f32 0.5, %v820
    %v822 = vsub.f32 1.5, %v821
    %v823 = vmul.f32 %v818, %v822
    %vm824 = vweird.f32 %v807
    %vm825 = vweird.f32 %v818
    %vm826 = vmor %vm824, %vm825
    %v827 = vsel %vm826, %v818, %v823
    %v828 = vmul.f32 %v794, %v817
    %v829 = vmul.f32 %v795, %v827
    %v831 = vperm.slane %v784, 0
    %v833 = vmul.f32 %v828, %v831
    %v834 = vmul.f32 %v829, %v831
    %v836 = vperm.slane %v785, 0
    %v838 = vadd.f32 %v833, %v836
    %v839 = vadd.f32 %v834, %v836
    %v840 = vpack.c.bf16 %v839, %v838
    %s841 = scalar_lea.vmem %s5, 16
    %v842 = vld [vmem:[%s841] sm:$0xf]
    %v843 = vld [vmem:[%s841 + $0x4] sm:$0xf]
    %v844 = vld [vmem:[%s841 + $0x8] sm:$0xf]
    %v845 = vld [vmem:[%s841 + $0xc] sm:$0xf]
    %s846 = scalar_lea.vmem %s6, 1
    %v847 = vld [vmem:[%s846] sm:$0x1]
    %v849 = vperm.slane %v847, 0
    %v855 = vunpack.c.l.b16 %v842
    %v856 = vunpack.c.l.b16 %v843
    %v857 = vunpack.c.l.b16 %v844
    %v858 = vunpack.c.l.b16 %v845
    %v859 = vpack.c.b16 %v856, %v855
    %v860 = vpack.c.b16 %v858, %v857
    %v864 = vsel %vm70, %v840, 0
    %866 = vmatpush.bf16.msra.mxu0 0
    %867 = vmatpush.bf16.msra.mxu0 0
    %868 = vmatpush.bf16.msra.mxu0 0
    %869 = vmatpush.bf16.msra.mxu0 0
    %870 = vmatpush.bf16.msra.mxu0 0
    %871 = vmatpush.bf16.msra.mxu0 0
    %872 = vmatpush.bf16.msra.mxu0 %v860
    %873 = vmatpush.bf16.msra.mxu0 %v859
    %874 = vmatmul.bf16.gmra.mxu0 %v864
    %v875 = vpop.f32.mrf.mxu0
    %v876 = vadd.f32 %v849, %v875
    %v877 = vpop.f32.mrf.mxu0
    %v878 = vadd.f32 %v849, %v877
    %879 = vdwg.mxu0
    %881 = vrot.lane.b32.xlu0 %v876, 120
    %v882 = vpop.permute.xlu0 %881
    %884 = vrot.lane.b32.xlu0 %v876, 112
    %v885 = vpop.permute.xlu0 %884
    %887 = vrot.lane.b32.xlu0 %v876, 104
    %v888 = vpop.permute.xlu0 %887
    %891 = vrot.lane.b32.xlu0 %v878, 120
    %v892 = vpop.permute.xlu0 %891
    %894 = vrot.lane.b32.xlu0 %v878, 112
    %v895 = vpop.permute.xlu0 %894
    %897 = vrot.lane.b32.xlu0 %v878, 104
    %v898 = vpop.permute.xlu0 %897
    %v900 = vpack.c.bf16 %v882, %v876
    %v901 = vpack.c.bf16 %v888, %v885
    %v902 = vpack.c.bf16 %v892, %v878
    %v903 = vpack.c.bf16 %v898, %v895
    %908 = vrot.lane.b32.xlu0 %v900, 96
    %v909 = vpop.permute.xlu0 %908
    %910 = vrot.lane.b32.xlu0 %v901, 96
    %v911 = vpop.permute.xlu0 %910
    %912 = vrot.lane.b32.xlu0 %v902, 96
    %v913 = vpop.permute.xlu0 %912
    %914 = vrot.lane.b32.xlu0 %v903, 96
    %v915 = vpop.permute.xlu0 %914
    %v917 = vsel %vm206, %v900, 0
    %v920 = vsel %vm206, %v901, 0
    %v923 = vsel %vm206, %v902, 0
    %v926 = vsel %vm206, %v903, 0
    %v929 = vsel %vm206, %v909, 0
    %v932 = vsel %vm206, %v911, 0
    %v935 = vsel %vm206, %v913, 0
    %v938 = vsel %vm206, %v915, 0
    %940 = vmatpush.bf16.xpose.msra.mxu0 0
    %941 = vmatpush.bf16.xpose.msra.mxu0 0
    %942 = vmatpush.bf16.xpose.msra.mxu0 0
    %943 = vmatpush.bf16.xpose.msra.mxu0 0
    %944 = vmatpush.bf16.xpose.msra.mxu0 %v938
    %945 = vmatpush.bf16.xpose.msra.mxu0 %v935
    %946 = vmatpush.bf16.xpose.msra.mxu0 %v932
    %947 = vmatpush.bf16.xpose.msra.mxu0 %v929
    %948 = vmatmul.bf16.gmra.mxu0 %v917
    %v949 = vpop.f32.mrf.mxu0
    %v950 = vadd.f32 %v58, %v949
    %v951 = vpop.f32.mrf.mxu0
    %v952 = vadd.f32 %v59, %v951
    %953 = vmatmul.bf16.gmra.mxu0 %v920
    %v954 = vpop.f32.mrf.mxu0
    %v955 = vadd.f32 %v60, %v954
    %v956 = vpop.f32.mrf.mxu0
    %v957 = vadd.f32 %v61, %v956
    %958 = vmatmul.bf16.gmra.mxu0 %v923
    %v959 = vpop.f32.mrf.mxu0
    %v960 = vadd.f32 %v62, %v959
    %v961 = vpop.f32.mrf.mxu0
    %v962 = vadd.f32 %v63, %v961
    %963 = vmatmul.bf16.gmra.mxu0 %v926
    %v964 = vpop.f32.mrf.mxu0
    %v965 = vadd.f32 %v64, %v964
    %v966 = vpop.f32.mrf.mxu0
    %v967 = vadd.f32 %v65, %v966
    %968 = vdwg.mxu0
    %v969 = vsel %vm260, %v950, -inf
    %970 = vmax.xlane.f32.xlu0 %v969
    %v971 = vpop.xlane.xlu0 %970
    %v972 = vsel %vm260, %v952, -inf
    %973 = vmax.xlane.f32.xlu0 %v972
    %v974 = vpop.xlane.xlu0 %973
    %v975 = vsel %vm260, %v955, -inf
    %976 = vmax.xlane.f32.xlu0 %v975
    %v977 = vpop.xlane.xlu0 %976
    %v978 = vsel %vm260, %v957, -inf
    %979 = vmax.xlane.f32.xlu0 %v978
    %v980 = vpop.xlane.xlu0 %979
    %v981 = vsel %vm260, %v960, -inf
    %982 = vmax.xlane.f32.xlu0 %v981
    %v983 = vpop.xlane.xlu0 %982
    %v984 = vsel %vm260, %v962, -inf
    %985 = vmax.xlane.f32.xlu0 %v984
    %v986 = vpop.xlane.xlu0 %985
    %v987 = vsel %vm260, %v965, -inf
    %988 = vmax.xlane.f32.xlu0 %v987
    %v989 = vpop.xlane.xlu0 %988
    %v990 = vsel %vm260, %v967, -inf
    %991 = vmax.xlane.f32.xlu0 %v990
    %v992 = vpop.xlane.xlu0 %991
    %v993 = vsub.f32 %v950, %v971
    %v994 = vsub.f32 %v952, %v974
    %v995 = vsub.f32 %v955, %v977
    %v996 = vsub.f32 %v957, %v980
    %v997 = vsub.f32 %v960, %v983
    %v998 = vsub.f32 %v962, %v986
    %v999 = vsub.f32 %v965, %v989
    %v1000 = vsub.f32 %v967, %v992
    %v1001 = vmul.f32 %v993, 1.442695
    %v1002 = vpow.pop %v1001
    %v1003 = vmul.f32 %v994, 1.442695
    %v1004 = vpow.pop %v1003
    %v1005 = vmul.f32 %v995, 1.442695
    %v1006 = vpow.pop %v1005
    %v1007 = vmul.f32 %v996, 1.442695
    %v1008 = vpow.pop %v1007
    %v1009 = vmul.f32 %v997, 1.442695
    %v1010 = vpow.pop %v1009
    %v1011 = vmul.f32 %v998, 1.442695
    %v1012 = vpow.pop %v1011
    %v1013 = vmul.f32 %v999, 1.442695
    %v1014 = vpow.pop %v1013
    %v1015 = vmul.f32 %v1000, 1.442695
    %v1016 = vpow.pop %v1015
    %v1017 = vsel %vm260, %v1002, 0.0
    %1018 = vadd.xlane.f32.xlu0 %v1017
    %v1019 = vpop.xlane.xlu0 %1018
    %v1020 = vsel %vm260, %v1004, 0.0
    %1021 = vadd.xlane.f32.xlu0 %v1020
    %v1022 = vpop.xlane.xlu0 %1021
    %v1023 = vsel %vm260, %v1006, 0.0
    %1024 = vadd.xlane.f32.xlu0 %v1023
    %v1025 = vpop.xlane.xlu0 %1024
    %v1026 = vsel %vm260, %v1008, 0.0
    %1027 = vadd.xlane.f32.xlu0 %v1026
    %v1028 = vpop.xlane.xlu0 %1027
    %v1029 = vsel %vm260, %v1010, 0.0
    %1030 = vadd.xlane.f32.xlu0 %v1029
    %v1031 = vpop.xlane.xlu0 %1030
    %v1032 = vsel %vm260, %v1012, 0.0
    %1033 = vadd.xlane.f32.xlu0 %v1032
    %v1034 = vpop.xlane.xlu0 %1033
    %v1035 = vsel %vm260, %v1014, 0.0
    %1036 = vadd.xlane.f32.xlu0 %v1035
    %v1037 = vpop.xlane.xlu0 %1036
    %v1038 = vsel %vm260, %v1016, 0.0
    %1039 = vadd.xlane.f32.xlu0 %v1038
    %v1040 = vpop.xlane.xlu0 %1039
    %v1041 = vrcp.pop %v1019
    %v1042 = vmul.f32 %v1019, %v1041
    %v1043 = vsub.f32 1.0, %v1042
    %v1044 = vmul.f32 %v1041, %v1043
    %v1045 = vadd.f32 %v1041, %v1044
    %vm1046 = vweird.f32 %v1019
    %vm1047 = vweird.f32 %v1041
    %vm1048 = vmor %vm1046, %vm1047
    %v1049 = vsel %vm1048, %v1041, %v1045
    %v1050 = vand.u32 2147483647, %v1019
    %vm1051 = vcmp.eq.f32.partialorder %v1050, 8.507059e+37
    %v1052 = vand.u32 %v1019, 2147483648
    %v1053 = vor.u32 1.1754944e-38, %v1052
    %v1054 = vsel %vm1051, %v1053, %v1049
    %v1055 = vmul.f32 %v1002, %v1054
    %v1056 = vrcp.pop %v1022
    %v1057 = vmul.f32 %v1022, %v1056
    %v1058 = vsub.f32 1.0, %v1057
    %v1059 = vmul.f32 %v1056, %v1058
    %v1060 = vadd.f32 %v1056, %v1059
    %vm1061 = vweird.f32 %v1022
    %vm1062 = vweird.f32 %v1056
    %vm1063 = vmor %vm1061, %vm1062
    %v1064 = vsel %vm1063, %v1056, %v1060
    %v1065 = vand.u32 2147483647, %v1022
    %vm1066 = vcmp.eq.f32.partialorder %v1065, 8.507059e+37
    %v1067 = vand.u32 %v1022, 2147483648
    %v1068 = vor.u32 1.1754944e-38, %v1067
    %v1069 = vsel %vm1066, %v1068, %v1064
    %v1070 = vmul.f32 %v1004, %v1069
    %v1071 = vrcp.pop %v1025
    %v1072 = vmul.f32 %v1025, %v1071
    %v1073 = vsub.f32 1.0, %v1072
    %v1074 = vmul.f32 %v1071, %v1073
    %v1075 = vadd.f32 %v1071, %v1074
    %vm1076 = vweird.f32 %v1025
    %vm1077 = vweird.f32 %v1071
    %vm1078 = vmor %vm1076, %vm1077
    %v1079 = vsel %vm1078, %v1071, %v1075
    %v1080 = vand.u32 2147483647, %v1025
    %vm1081 = vcmp.eq.f32.partialorder %v1080, 8.507059e+37
    %v1082 = vand.u32 %v1025, 2147483648
    %v1083 = vor.u32 1.1754944e-38, %v1082
    %v1084 = vsel %vm1081, %v1083, %v1079
    %v1085 = vmul.f32 %v1006, %v1084
    %v1086 = vrcp.pop %v1028
    %v1087 = vmul.f32 %v1028, %v1086
    %v1088 = vsub.f32 1.0, %v1087
    %v1089 = vmul.f32 %v1086, %v1088
    %v1090 = vadd.f32 %v1086, %v1089
    %vm1091 = vweird.f32 %v1028
    %vm1092 = vweird.f32 %v1086
    %vm1093 = vmor %vm1091, %vm1092
    %v1094 = vsel %vm1093, %v1086, %v1090
    %v1095 = vand.u32 2147483647, %v1028
    %vm1096 = vcmp.eq.f32.partialorder %v1095, 8.507059e+37
    %v1097 = vand.u32 %v1028, 2147483648
    %v1098 = vor.u32 1.1754944e-38, %v1097
    %v1099 = vsel %vm1096, %v1098, %v1094
    %v1100 = vmul.f32 %v1008, %v1099
    %v1101 = vrcp.pop %v1031
    %v1102 = vmul.f32 %v1031, %v1101
    %v1103 = vsub.f32 1.0, %v1102
    %v1104 = vmul.f32 %v1101, %v1103
    %v1105 = vadd.f32 %v1101, %v1104
    %vm1106 = vweird.f32 %v1031
    %vm1107 = vweird.f32 %v1101
    %vm1108 = vmor %vm1106, %vm1107
    %v1109 = vsel %vm1108, %v1101, %v1105
    %v1110 = vand.u32 2147483647, %v1031
    %vm1111 = vcmp.eq.f32.partialorder %v1110, 8.507059e+37
    %v1112 = vand.u32 %v1031, 2147483648
    %v1113 = vor.u32 1.1754944e-38, %v1112
    %v1114 = vsel %vm1111, %v1113, %v1109
    %v1115 = vmul.f32 %v1010, %v1114
    %v1116 = vrcp.pop %v1034
    %v1117 = vmul.f32 %v1034, %v1116
    %v1118 = vsub.f32 1.0, %v1117
    %v1119 = vmul.f32 %v1116, %v1118
    %v1120 = vadd.f32 %v1116, %v1119
    %vm1121 = vweird.f32 %v1034
    %vm1122 = vweird.f32 %v1116
    %vm1123 = vmor %vm1121, %vm1122
    %v1124 = vsel %vm1123, %v1116, %v1120
    %v1125 = vand.u32 2147483647, %v1034
    %vm1126 = vcmp.eq.f32.partialorder %v1125, 8.507059e+37
    %v1127 = vand.u32 %v1034, 2147483648
    %v1128 = vor.u32 1.1754944e-38, %v1127
    %v1129 = vsel %vm1126, %v1128, %v1124
    %v1130 = vmul.f32 %v1012, %v1129
    %v1131 = vrcp.pop %v1037
    %v1132 = vmul.f32 %v1037, %v1131
    %v1133 = vsub.f32 1.0, %v1132
    %v1134 = vmul.f32 %v1131, %v1133
    %v1135 = vadd.f32 %v1131, %v1134
    %vm1136 = vweird.f32 %v1037
    %vm1137 = vweird.f32 %v1131
    %vm1138 = vmor %vm1136, %vm1137
    %v1139 = vsel %vm1138, %v1131, %v1135
    %v1140 = vand.u32 2147483647, %v1037
    %vm1141 = vcmp.eq.f32.partialorder %v1140, 8.507059e+37
    %v1142 = vand.u32 %v1037, 2147483648
    %v1143 = vor.u32 1.1754944e-38, %v1142
    %v1144 = vsel %vm1141, %v1143, %v1139
    %v1145 = vmul.f32 %v1014, %v1144
    %v1146 = vrcp.pop %v1040
    %v1147 = vmul.f32 %v1040, %v1146
    %v1148 = vsub.f32 1.0, %v1147
    %v1149 = vmul.f32 %v1146, %v1148
    %v1150 = vadd.f32 %v1146, %v1149
    %vm1151 = vweird.f32 %v1040
    %vm1152 = vweird.f32 %v1146
    %vm1153 = vmor %vm1151, %vm1152
    %v1154 = vsel %vm1153, %v1146, %v1150
    %v1155 = vand.u32 2147483647, %v1040
    %vm1156 = vcmp.eq.f32.partialorder %v1155, 8.507059e+37
    %v1157 = vand.u32 %v1040, 2147483648
    %v1158 = vor.u32 1.1754944e-38, %v1157
    %v1159 = vsel %vm1156, %v1158, %v1154
    %v1160 = vmul.f32 %v1016, %v1159
    %v1161 = vpack.c.bf16 %v1070, %v1055
    %v1162 = vpack.c.bf16 %v1100, %v1085
    %v1163 = vpack.c.bf16 %v1130, %v1115
    %v1164 = vpack.c.bf16 %v1160, %v1145
    %1165 = vrot.lane.b32.xlu0 %v900, 64
    %v1166 = vpop.permute.xlu0 %1165
    %1167 = vrot.lane.b32.xlu0 %v901, 64
    %v1168 = vpop.permute.xlu0 %1167
    %1169 = vrot.lane.b32.xlu0 %v902, 64
    %v1170 = vpop.permute.xlu0 %1169
    %1171 = vrot.lane.b32.xlu0 %v903, 64
    %v1172 = vpop.permute.xlu0 %1171
    %v1178 = vsel %vm260, %v1161, 0
    %v1181 = vsel %vm260, %v1162, 0
    %v1184 = vsel %vm260, %v1163, 0
    %v1187 = vsel %vm260, %v1164, 0
    %1189 = vmatpush.bf16.msra.mxu0 0
    %1190 = vmatpush.bf16.msra.mxu0 0
    %1191 = vmatpush.bf16.msra.mxu0 0
    %1192 = vmatpush.bf16.msra.mxu0 0
    %1193 = vmatpush.bf16.msra.mxu0 %v1172
    %1194 = vmatpush.bf16.msra.mxu0 %v1170
    %1195 = vmatpush.bf16.msra.mxu0 %v1168
    %1196 = vmatpush.bf16.msra.mxu0 %v1166
    %1197 = vmatmul.bf16.gmra.mxu0 %v1178
    %v1198 = vpop.f32.mrf.mxu0
    %v1199 = vadd.f32 0.0, %v1198
    %v1200 = vpop.f32.mrf.mxu0
    %v1201 = vadd.f32 0.0, %v1200
    %1202 = vmatmul.bf16.gmra.mxu0 %v1181
    %v1203 = vpop.f32.mrf.mxu0
    %v1204 = vadd.f32 0.0, %v1203
    %v1205 = vpop.f32.mrf.mxu0
    %v1206 = vadd.f32 0.0, %v1205
    %1207 = vmatmul.bf16.gmra.mxu0 %v1184
    %v1208 = vpop.f32.mrf.mxu0
    %v1209 = vadd.f32 0.0, %v1208
    %v1210 = vpop.f32.mrf.mxu0
    %v1211 = vadd.f32 0.0, %v1210
    %1212 = vmatmul.bf16.gmra.mxu0 %v1187
    %v1213 = vpop.f32.mrf.mxu0
    %v1214 = vadd.f32 0.0, %v1213
    %v1215 = vpop.f32.mrf.mxu0
    %v1216 = vadd.f32 0.0, %v1215
    %1217 = vdwg.mxu0
    %s1218 = scalar_lea.vmem %s8, 1
    %v1219 = vld [vmem:[%s1218] sm:$0x1]
    %v1220 = vpack.c.bf16 %v1209, %v1199
    %s1221 = scalar_lea.vmem %s7, 16
    %v1222 = vld [vmem:[%s1221] sm:$0xf]
    %v1224 = vsel %vm206, %v1220, 0
    %v1227 = vsel %vm516, %v1222, 0
    %1229 = vmatpush.bf16.msra.mxu0 0
    %1230 = vmatpush.bf16.msra.mxu0 0
    %1231 = vmatpush.bf16.msra.mxu0 0
    %1232 = vmatpush.bf16.msra.mxu0 0
    %1233 = vmatpush.bf16.msra.mxu0 0
    %1234 = vmatpush.bf16.msra.mxu0 0
    %1235 = vmatpush.bf16.msra.mxu0 0
    %1236 = vmatpush.bf16.msra.mxu0 %v1227
    %1237 = vmatmul.bf16.gmra.mxu0 %v1224
    %v1238 = vpop.f32.mrf.mxu0
    %v1239 = vadd.f32 0.0, %v1238
    %v1240 = vpop.f32.mrf.mxu0
    %v1241 = vadd.f32 0.0, %v1240
    %1242 = vdwg.mxu0
    %v1244 = vperm.slane %v1219, 0
    %v1246 = vadd.f32 %v1244, %v1239
    %v1247 = vadd.f32 %v1244, %v1241
    %v1248 = vpack.c.bf16 %v1211, %v1201
    %s1249 = scalar_lea.vmem %s7, 20
    %v1250 = vld [vmem:[%s1249] sm:$0xf]
    %v1252 = vsel %vm206, %v1248, 0
    %v1255 = vsel %vm516, %v1250, 0
    %1257 = vmatpush.bf16.msra.mxu0 0
    %1258 = vmatpush.bf16.msra.mxu0 0
    %1259 = vmatpush.bf16.msra.mxu0 0
    %1260 = vmatpush.bf16.msra.mxu0 0
    %1261 = vmatpush.bf16.msra.mxu0 0
    %1262 = vmatpush.bf16.msra.mxu0 0
    %1263 = vmatpush.bf16.msra.mxu0 0
    %1264 = vmatpush.bf16.msra.mxu0 %v1255
    %1265 = vmatmul.bf16.gmra.mxu0 %v1252
    %v1266 = vpop.f32.mrf.mxu0
    %v1267 = vadd.f32 0.0, %v1266
    %v1268 = vpop.f32.mrf.mxu0
    %v1269 = vadd.f32 0.0, %v1268
    %1270 = vdwg.mxu0
    %v1271 = vadd.f32 %v1246, %v1267
    %v1272 = vadd.f32 %v1247, %v1269
    %v1273 = vpack.c.bf16 %v1214, %v1204
    %s1274 = scalar_lea.vmem %s7, 24
    %v1275 = vld [vmem:[%s1274] sm:$0xf]
    %v1277 = vsel %vm206, %v1273, 0
    %v1280 = vsel %vm516, %v1275, 0
    %1282 = vmatpush.bf16.msra.mxu0 0
    %1283 = vmatpush.bf16.msra.mxu0 0
    %1284 = vmatpush.bf16.msra.mxu0 0
    %1285 = vmatpush.bf16.msra.mxu0 0
    %1286 = vmatpush.bf16.msra.mxu0 0
    %1287 = vmatpush.bf16.msra.mxu0 0
    %1288 = vmatpush.bf16.msra.mxu0 0
    %1289 = vmatpush.bf16.msra.mxu0 %v1280
    %1290 = vmatmul.bf16.gmra.mxu0 %v1277
    %v1291 = vpop.f32.mrf.mxu0
    %v1292 = vadd.f32 0.0, %v1291
    %v1293 = vpop.f32.mrf.mxu0
    %v1294 = vadd.f32 0.0, %v1293
    %1295 = vdwg.mxu0
    %v1296 = vadd.f32 %v1271, %v1292
    %v1297 = vadd.f32 %v1272, %v1294
    %v1298 = vpack.c.bf16 %v1216, %v1206
    %s1299 = scalar_lea.vmem %s7, 28
    %v1300 = vld [vmem:[%s1299] sm:$0xf]
    %v1302 = vsel %vm206, %v1298, 0
    %v1305 = vsel %vm516, %v1300, 0
    %1307 = vmatpush.bf16.msra.mxu0 0
    %1308 = vmatpush.bf16.msra.mxu0 0
    %1309 = vmatpush.bf16.msra.mxu0 0
    %1310 = vmatpush.bf16.msra.mxu0 0
    %1311 = vmatpush.bf16.msra.mxu0 0
    %1312 = vmatpush.bf16.msra.mxu0 0
    %1313 = vmatpush.bf16.msra.mxu0 0
    %1314 = vmatpush.bf16.msra.mxu0 %v1305
    %1315 = vmatmul.bf16.gmra.mxu0 %v1302
    %v1316 = vpop.f32.mrf.mxu0
    %v1317 = vadd.f32 0.0, %v1316
    %v1318 = vpop.f32.mrf.mxu0
    %v1319 = vadd.f32 0.0, %v1318
    %1320 = vdwg.mxu0
    %v1321 = vadd.f32 %v1296, %v1317
    %v1322 = vadd.f32 %v1297, %v1319
    %v1323 = vadd.f32 %v1321, %v838
    %v1324 = vadd.f32 %v1322, %v839
    %s1325 = scalar_lea.vmem %s9, 1
    %v1326 = vld [vmem:[%s1325] sm:$0x1]
    %s1327 = scalar_lea.vmem %s10, 1
    %v1328 = vld [vmem:[%s1327] sm:$0x1]
    %v1329 = vsel %vm70, %v1323, 0.0
    %1330 = vadd.xlane.f32.xlu0 %v1329
    %v1331 = vpop.xlane.xlu0 %1330
    %v1332 = vsel %vm70, %v1324, 0.0
    %1333 = vadd.xlane.f32.xlu0 %v1332
    %v1334 = vpop.xlane.xlu0 %1333
    %v1335 = vmul.f32 %v1331, %v83
    %v1336 = vmul.f32 %v1334, %v83
    %v1337 = vsub.f32 %v1323, %v1335
    %v1338 = vsub.f32 %v1324, %v1336
    %v1339 = vmul.f32 %v1337, %v1337
    %v1340 = vmul.f32 %v1338, %v1338
    %v1341 = vsel %vm70, %v1339, 0.0
    %1342 = vadd.xlane.f32.xlu0 %v1341
    %v1343 = vpop.xlane.xlu0 %1342
    %v1344 = vsel %vm70, %v1340, 0.0
    %1345 = vadd.xlane.f32.xlu0 %v1344
    %v1346 = vpop.xlane.xlu0 %1345
    %v1347 = vmul.f32 %v1343, %v83
    %v1348 = vmul.f32 %v1346, %v83
    %v1349 = vadd.f32 %v1347, 1e-12
    %v1350 = vadd.f32 %v1348, 1e-12
    %v1351 = vrsqrt.pop %v1349
    %v1352 = vmul.f32 %v1351, %v1349
    %v1353 = vmul.f32 %v1352, %v1351
    %v1354 = vmul.f32 0.5, %v1353
    %v1355 = vsub.f32 1.5, %v1354
    %v1356 = vmul.f32 %v1351, %v1355
    %vm1357 = vweird.f32 %v1349
    %vm1358 = vweird.f32 %v1351
    %vm1359 = vmor %vm1357, %vm1358
    %v1360 = vsel %vm1359, %v1351, %v1356
    %v1361 = vrsqrt.pop %v1350
    %v1362 = vmul.f32 %v1361, %v1350
    %v1363 = vmul.f32 %v1362, %v1361
    %v1364 = vmul.f32 0.5, %v1363
    %v1365 = vsub.f32 1.5, %v1364
    %v1366 = vmul.f32 %v1361, %v1365
    %vm1367 = vweird.f32 %v1350
    %vm1368 = vweird.f32 %v1361
    %vm1369 = vmor %vm1367, %vm1368
    %v1370 = vsel %vm1369, %v1361, %v1366
    %v1371 = vmul.f32 %v1337, %v1360
    %v1372 = vmul.f32 %v1338, %v1370
    %v1374 = vperm.slane %v1326, 0
    %v1376 = vmul.f32 %v1371, %v1374
    %v1377 = vmul.f32 %v1372, %v1374
    %v1379 = vperm.slane %v1328, 0
    %v1381 = vadd.f32 %v1376, %v1379
    %v1382 = vadd.f32 %v1377, %v1379
    %v1383 = vpack.c.bf16 %v1382, %v1381
    %s1384 = scalar_lea.vmem %s11, 16
    %v1385 = vld [vmem:[%s1384] sm:$0xf]
    %v1386 = vld [vmem:[%s1384 + $0x4] sm:$0xf]
    %v1387 = vld [vmem:[%s1384 + $0x8] sm:$0xf]
    %v1388 = vld [vmem:[%s1384 + $0xc] sm:$0xf]
    %s1389 = scalar_lea.vmem %s12, 1
    %v1390 = vld [vmem:[%s1389] sm:$0x1]
    %v1392 = vperm.slane %v1390, 0
    %v1398 = vunpack.c.l.b16 %v1385
    %v1399 = vunpack.c.l.b16 %v1386
    %v1400 = vunpack.c.l.b16 %v1387
    %v1401 = vunpack.c.l.b16 %v1388
    %v1402 = vpack.c.b16 %v1399, %v1398
    %v1403 = vpack.c.b16 %v1401, %v1400
    %v1407 = vsel %vm70, %v1383, 0
    %1409 = vmatpush.bf16.msra.mxu0 0
    %1410 = vmatpush.bf16.msra.mxu0 0
    %1411 = vmatpush.bf16.msra.mxu0 0
    %1412 = vmatpush.bf16.msra.mxu0 0
    %1413 = vmatpush.bf16.msra.mxu0 0
    %1414 = vmatpush.bf16.msra.mxu0 0
    %1415 = vmatpush.bf16.msra.mxu0 %v1403
    %1416 = vmatpush.bf16.msra.mxu0 %v1402
    %1417 = vmatmul.bf16.gmra.mxu0 %v1407
    %v1418 = vpop.f32.mrf.mxu0
    %v1419 = vadd.f32 %v1392, %v1418
    %v1420 = vpop.f32.mrf.mxu0
    %v1421 = vadd.f32 %v1392, %v1420
    %1422 = vdwg.mxu0
    %v1423 = vmul.f32 %v1419, %v1419
    %v1424 = vmul.f32 %v1421, %v1421
    %v1425 = vmul.f32 %v1419, %v1423
    %v1426 = vmul.f32 %v1421, %v1424
    %v1427 = vmul.f32 %v1425, 0.044715
    %v1428 = vmul.f32 %v1426, 0.044715
    %v1429 = vadd.f32 %v1419, %v1427
    %v1430 = vadd.f32 %v1421, %v1428
    %v1431 = vmul.f32 %v1429, 0.7978846
    %v1432 = vmul.f32 %v1430, 0.7978846
    %v1433 = vtanh.pop %v1431
    %v1434 = vtanh.pop %v1432
    %v1435 = vadd.f32 %v1433, 1.0
    %v1436 = vadd.f32 %v1434, 1.0
    %v1437 = vmul.f32 %v1435, 0.5
    %v1438 = vmul.f32 %v1436, 0.5
    %v1439 = vmul.f32 %v1419, %v1437
    %v1440 = vmul.f32 %v1421, %v1438
    %v1441 = vpack.c.bf16 %v1440, %v1439
    %s1442 = scalar_lea.vmem %s13, 32
    %v1443 = vld [vmem:[%s1442] sm:$0xf]
    %v1444 = vld [vmem:[%s1442 + $0x4] sm:$0xf]
    %v1445 = vld [vmem:[%s1442 + $0x8] sm:$0xf]
    %v1446 = vld [vmem:[%s1442 + $0xc] sm:$0xf]
    %v1447 = vld [vmem:[%s1442 + $0x10] sm:$0xf]
    %v1448 = vld [vmem:[%s1442 + $0x14] sm:$0xf]
    %v1449 = vld [vmem:[%s1442 + $0x18] sm:$0xf]
    %v1450 = vld [vmem:[%s1442 + $0x1c] sm:$0xf]
    %s1451 = scalar_lea.vmem %s14, 1
    %v1452 = vld [vmem:[%s1451] sm:$0x1]
    %v1454 = vperm.slane %v1452, 0
    %v1464 = vunpack.c.l.b16 %v1443
    %v1465 = vunpack.c.l.b16 %v1444
    %v1466 = vunpack.c.l.b16 %v1445
    %v1467 = vunpack.c.l.b16 %v1446
    %v1468 = vunpack.c.l.b16 %v1447
    %v1469 = vunpack.c.l.b16 %v1448
    %v1470 = vunpack.c.l.b16 %v1449
    %v1471 = vunpack.c.l.b16 %v1450
    %v1472 = vpack.c.b16 %v1465, %v1464
    %v1473 = vpack.c.b16 %v1467, %v1466
    %v1474 = vpack.c.b16 %v1469, %v1468
    %v1475 = vpack.c.b16 %v1471, %v1470
    %v1481 = vsel %vm260, %v1441, 0
    %1483 = vmatpush.bf16.msra.mxu0 0
    %1484 = vmatpush.bf16.msra.mxu0 0
    %1485 = vmatpush.bf16.msra.mxu0 0
    %1486 = vmatpush.bf16.msra.mxu0 0
    %1487 = vmatpush.bf16.msra.mxu0 %v1475
    %1488 = vmatpush.bf16.msra.mxu0 %v1474
    %1489 = vmatpush.bf16.msra.mxu0 %v1473
    %1490 = vmatpush.bf16.msra.mxu0 %v1472
    %1491 = vmatmul.bf16.gmra.mxu0 %v1481
    %v1492 = vpop.f32.mrf.mxu0
    %v1493 = vadd.f32 %v1454, %v1492
    %v1494 = vpop.f32.mrf.mxu0
    %v1495 = vadd.f32 %v1454, %v1494
    %1496 = vdwg.mxu0
    %v1497 = vadd.f32 %v1493, %v1381
    %v1498 = vadd.f32 %v1495, %v1382
    %s1499 = scalar_lea.vmem %s15, 1
    %v1500 = vld [vmem:[%s1499] sm:$0x1]
    %s1501 = scalar_lea.vmem %s16, 1
    %v1502 = vld [vmem:[%s1501] sm:$0x1]
    %v1503 = vsel %vm70, %v1497, 0.0
    %1504 = vadd.xlane.f32.xlu0 %v1503
    %v1505 = vpop.xlane.xlu0 %1504
    %v1506 = vsel %vm70, %v1498, 0.0
    %1507 = vadd.xlane.f32.xlu0 %v1506
    %v1508 = vpop.xlane.xlu0 %1507
    %v1509 = vmul.f32 %v1505, %v83
    %v1510 = vmul.f32 %v1508, %v83
    %v1511 = vsub.f32 %v1497, %v1509
    %v1512 = vsub.f32 %v1498, %v1510
    %v1513 = vmul.f32 %v1511, %v1511
    %v1514 = vmul.f32 %v1512, %v1512
    %v1515 = vsel %vm70, %v1513, 0.0
    %1516 = vadd.xlane.f32.xlu0 %v1515
    %v1517 = vpop.xlane.xlu0 %1516
    %v1518 = vsel %vm70, %v1514, 0.0
    %1519 = vadd.xlane.f32.xlu0 %v1518
    %v1520 = vpop.xlane.xlu0 %1519
    %v1521 = vmul.f32 %v1517, %v83
    %v1522 = vmul.f32 %v1520, %v83
    %v1523 = vadd.f32 %v1521, 1e-12
    %v1524 = vadd.f32 %v1522, 1e-12
    %v1525 = vrsqrt.pop %v1523
    %v1526 = vmul.f32 %v1525, %v1523
    %v1527 = vmul.f32 %v1526, %v1525
    %v1528 = vmul.f32 0.5, %v1527
    %v1529 = vsub.f32 1.5, %v1528
    %v1530 = vmul.f32 %v1525, %v1529
    %vm1531 = vweird.f32 %v1523
    %vm1532 = vweird.f32 %v1525
    %vm1533 = vmor %vm1531, %vm1532
    %v1534 = vsel %vm1533, %v1525, %v1530
    %v1535 = vrsqrt.pop %v1524
    %v1536 = vmul.f32 %v1535, %v1524
    %v1537 = vmul.f32 %v1536, %v1535
    %v1538 = vmul.f32 0.5, %v1537
    %v1539 = vsub.f32 1.5, %v1538
    %v1540 = vmul.f32 %v1535, %v1539
    %vm1541 = vweird.f32 %v1524
    %vm1542 = vweird.f32 %v1535
    %vm1543 = vmor %vm1541, %vm1542
    %v1544 = vsel %vm1543, %v1535, %v1540
    %v1545 = vmul.f32 %v1511, %v1534
    %v1546 = vmul.f32 %v1512, %v1544
    %v1548 = vperm.slane %v1500, 0
    %v1550 = vmul.f32 %v1545, %v1548
    %v1551 = vmul.f32 %v1546, %v1548
    %v1553 = vperm.slane %v1502, 0
    %v1555 = vadd.f32 %v1550, %v1553
    %v1556 = vadd.f32 %v1551, %v1553
    %v1557 = vld [vmem:[%s2] sm:$0x3]
    %vm1558 = vcmask 130048
    %v1560 = vsel %vm1558, %v1557, 0
    %1562 = vmatpush.msra.mxu0 0.0
    %1563 = vmatpush.msra.mxu0 0.0
    %1564 = vmatpush.msra.mxu0 0.0
    %1565 = vmatpush.msra.mxu0 0.0
    %1566 = vmatpush.msra.mxu0 0.0
    %1567 = vmatpush.msra.mxu0 0.0
    %1568 = vmatpush.msra.mxu0 0.0
    %1569 = vmatpush.msra.mxu0 0.0
    %1570 = vmatpush.msra.mxu0 0.0
    %1571 = vmatpush.msra.mxu0 0.0
    %1572 = vmatpush.msra.mxu0 0.0
    %1573 = vmatpush.msra.mxu0 0.0
    %1574 = vmatpush.msra.mxu0 0.0
    %1575 = vmatpush.msra.mxu0 0.0
    %1576 = vmatpush.msra.mxu0 %v1556
    %1577 = vmatpush.msra.mxu0 %v1555
    %1578 = vmatmul.f32.gmra.mxu0 %v1560
    %v1579 = vpop.f32.mrf.mxu0
    %v1580 = vadd.f32 0.0, %v1579
    %1581 = vdwg.mxu0
    %vm1582 = vcmask 254976
    %1583 = vst.msk [vmem:[#allocation2] sm:$0x3] %vm1582, %v1580
    // Predicated region
    $region70: #{transformer_encoder_forward.1} parent=1 // pred_check
      _
    $region71: #{transformer_encoder_forward.1} parent=1 // pred_check_branch
      %1585 = sbr.rel (0) target = $region73
    $region72: #{transformer_encoder_forward.1} parent=1 // pred_region
      %1587 = vsyncadd [#allocation3], 0
      %s1589 = sshll.u32 [#allocation2], 4
      %s1590 = int_to_ptr.vmem [resolvable:$true] %s1589
      %s1591 = sshll.u32 %s17, 4
      %s1592 = int_to_ptr.hbm [resolvable:$true] %s1591
      %1594 = dma.vmem_to_hbm [thread:$0]  %s1590, 32, %s1592, [#allocation3]
    $region73: #{transformer_encoder_forward.1} parent=1 // pred_fallthru
      _
    // Predicated region
    $region74: #{transformer_encoder_forward.1} parent=1 // pred_check
      _
    $region75: #{transformer_encoder_forward.1} parent=1 // pred_check_branch
      %1596 = sbr.rel (0) target = $region77
    $region76: #{transformer_encoder_forward.1} parent=1 // pred_region
      %1598 = dma.done [#allocation3], 32
    $region77: #{transformer_encoder_forward.1} parent=1 // pred_fallthru
      _
    %1599 = vsyncpa [#allocation3], 1

</llo_original>
